<compile_context>
chip_gen: v7x
topology: tpu7x:2x2x1
jax: 0.10.0
libtpu: 0.0.40
codegen_flags: <defaults>
</compile_context>

<pallas_src>
import numpy as np
import jax
import jax.numpy as jnp
from jax.experimental import pallas as pl
from jax.experimental.pallas import tpu as pltpu

LEAKY_RELU_GAIN = float(np.sqrt(2.0 / (1.0 + 0.2 ** 2)))
_EPS = 1e-8
_NUM_LAYERS = 8
_LANE = 128
_SUBLANE = 8


def _cdiv(a, b):
    return (a + b - 1) // b


def _round_up(x, m):
    return _cdiv(x, m) * m


def _make_style_mapper_kernel(n_layers, slopes, z_true_dim):
    """slopes[i]: LeakyReLU negative slope for layer i, or None (no activation)."""
    inv_z = 1.0 / float(z_true_dim)

    def kernel(*refs):
        z_ref = refs[0]
        w_refs = refs[1:1 + n_layers]                  # (in_pad, out_pad) bf16, scale folded in
        b_refs = refs[1 + n_layers:1 + 2 * n_layers]   # (1, out_pad) f32
        out_ref = refs[1 + 2 * n_layers]

        z = z_ref[...].astype(jnp.float32)             # (TB, Zp)
        # PixelNorm over the *true* feature count (padded lanes are zero).
        inv = jax.lax.rsqrt(jnp.sum(z * z, axis=1, keepdims=True) * inv_z + _EPS)
        h = z * inv

        for i in range(n_layers):
            # MXU: bf16 operands, f32 accumulate.
            acc = jnp.dot(h.astype(jnp.bfloat16), w_refs[i][...],
                          preferred_element_type=jnp.float32)
            h = acc + b_refs[i][...]
            if slopes[i] is not None:
                h = jnp.where(h >= 0, h, slopes[i] * h)

        out_ref[...] = h.astype(out_ref.dtype)

    return kernel


def style_mapper_forward(z, weights, biases, *, batch_tile=256):
    """z: (B, Z) f32. weights[i]: PyTorch Linear layout (out, in). biases[i]: (out,)."""
    B, Z = z.shape
    n = len(weights)
    assert n == _NUM_LAYERS and len(biases) == n
    S = weights[0].shape[0]

    # Weight_Scaling constants (true fan_in) and activation slopes per layer.
    fan_ins = [Z] + [S] * (n - 1)
    scales = [LEAKY_RELU_GAIN / float(np.sqrt(f)) for f in fan_ins]
    slopes = [0.01] + [0.2] * (n - 2) + [None]   # LeakyReLU() default is 0.01

    # Pad feature dims to lane multiples; zero padding is exact.
    Zp = _round_up(max(Z, _LANE), _LANE)
    Sp = _round_up(max(S, _LANE), _LANE)
    in_pads = [Zp] + [Sp] * (n - 1)

    def _prep_w(i, w):
        w = scales[i] * jnp.asarray(w, jnp.float32).T          # (in, out), scale folded in
        w = jnp.pad(w, ((0, in_pads[i] - w.shape[0]), (0, Sp - w.shape[1])))
        return w.astype(jnp.bfloat16)

    wts = [_prep_w(i, w) for i, w in enumerate(weights)]
    bs = [jnp.pad(jnp.asarray(b, jnp.float32), (0, Sp - S)).reshape(1, Sp)
          for b in biases]

    # Batch tiling: sublane-aligned, and >=2 grid steps when the batch allows
    # it so the "parallel" axis splits across the two TensorCores on v7x.
    B8 = _round_up(B, _SUBLANE)
    n_tiles = max(_cdiv(B8, batch_tile), 2 if B8 > _SUBLANE else 1)
    TB = _round_up(_cdiv(B8, n_tiles), _SUBLANE)
    B_pad = TB * n_tiles
    z_in = jnp.pad(jnp.asarray(z, jnp.float32), ((0, B_pad - B), (0, Zp - Z)))
    grid = (n_tiles,)

    kernel = _make_style_mapper_kernel(n, slopes, Z)

    def _call(single_buffer_consts):
        const_kwargs = ({"pipeline_mode": pl.Buffered(buffer_count=1)}
                        if single_buffer_consts else {})
        in_specs = [pl.BlockSpec((TB, Zp), lambda i: (i, 0))]
        in_specs += [pl.BlockSpec(w.shape, lambda i: (0, 0), **const_kwargs)
                     for w in wts]
        in_specs += [pl.BlockSpec(b.shape, lambda i: (0, 0), **const_kwargs)
                     for b in bs]
        return pl.pallas_call(
            kernel,
            out_shape=jax.ShapeDtypeStruct((B_pad, Sp), z.dtype),
            grid=grid,
            in_specs=in_specs,
            out_specs=pl.BlockSpec((TB, Sp), lambda i: (i, 0)),
            compiler_params=pltpu.CompilerParams(
                dimension_semantics=("parallel",),          # megacore split on v7x
                vmem_limit_bytes=64 * 1024 * 1024,
            ),
        )(z_in, *wts, *bs)

    try:
        # Preferred: single-buffer the VMEM-resident weights/biases (constant
        # index maps -> no need for double buffering).
        out = _call(True)
    except Exception:
        # Fallback if this jax build rejects pipeline_mode on BlockSpec; the
        # default double-buffered pipelining is correct, just uses more VMEM.
        out = _call(False)

    return out[:B, :S]


def style_mapper_reference(z, weights, biases):
    """Pure-JAX transcription of the PyTorch StyleMapper.forward (f32)."""
    z = z / jnp.sqrt(jnp.mean(z * z, axis=1, keepdims=True) + _EPS)
    h = z
    n = len(weights)
    for i in range(n):
        k = LEAKY_RELU_GAIN / np.sqrt(h.shape[1])
        h = (k * h) @ weights[i].T + biases[i]
        if i == 0:
            h = jnp.where(h >= 0, h, 0.01 * h)
        elif i < n - 1:
            h = jnp.where(h >= 0, h, 0.2 * h)
    return h


if __name__ == "__main__":
    key = jax.random.PRNGKey(0)
    B, Z, S = 2, 32, 32
    keys = jax.random.split(key, 1 + _NUM_LAYERS)

    z = jax.random.normal(keys[0], (B, Z), dtype=jnp.float32)
    in_dims = [Z] + [S] * (_NUM_LAYERS - 1)
    # init_weights(): weight ~ N(0, 1), bias = 0, PyTorch (out, in) layout.
    weights = [jax.random.normal(keys[1 + i], (S, in_dims[i]), dtype=jnp.float32)
               for i in range(_NUM_LAYERS)]
    biases = [jnp.zeros((S,), dtype=jnp.float32) for _ in range(_NUM_LAYERS)]

    out = jax.block_until_ready(style_mapper_forward(z, weights, biases))
    expected = style_mapper_reference(z, weights, biases)

    assert out.shape == (B, S)
    # bf16 MXU operands vs f32 reference -> loosened tolerance (per review).
    max_err = float(jnp.max(jnp.abs(out - expected)))
    assert jnp.allclose(out, expected, atol=1e-1, rtol=5e-2), ("max abs err", max_err)
    print("KERNEL_OK")
</pallas_src>

<mosaic_0001>
module attributes {stable_mosaic.version = 11 : i64} {
  func.func @kernel(%arg0: i32, %arg1: memref<8x128xf32, #tpu.memory_space<vmem>>, %arg2: memref<128x128xbf16, #tpu.memory_space<vmem>>, %arg3: memref<128x128xbf16, #tpu.memory_space<vmem>>, %arg4: memref<128x128xbf16, #tpu.memory_space<vmem>>, %arg5: memref<128x128xbf16, #tpu.memory_space<vmem>>, %arg6: memref<128x128xbf16, #tpu.memory_space<vmem>>, %arg7: memref<128x128xbf16, #tpu.memory_space<vmem>>, %arg8: memref<128x128xbf16, #tpu.memory_space<vmem>>, %arg9: memref<128x128xbf16, #tpu.memory_space<vmem>>, %arg10: memref<1x128xf32, #tpu.memory_space<vmem>>, %arg11: memref<1x128xf32, #tpu.memory_space<vmem>>, %arg12: memref<1x128xf32, #tpu.memory_space<vmem>>, %arg13: memref<1x128xf32, #tpu.memory_space<vmem>>, %arg14: memref<1x128xf32, #tpu.memory_space<vmem>>, %arg15: memref<1x128xf32, #tpu.memory_space<vmem>>, %arg16: memref<1x128xf32, #tpu.memory_space<vmem>>, %arg17: memref<1x128xf32, #tpu.memory_space<vmem>>, %arg18: memref<8x128xf32, #tpu.memory_space<vmem>>) attributes {dimension_semantics = [#tpu.dimension_semantics<parallel>], iteration_bounds = array<i64: 1>, scalar_prefetch = 0 : i64, scratch_operands = 0 : i64, tpu.core_type = #tpu.core_type<tc>, window_params = [{transform_indices = @transform_0, window_bounds = array<i64: 8, 128>}, {pipeline_mode = #tpu.pipeline_mode<synchronous>, transform_indices = @transform_1, window_bounds = array<i64: 128, 128>}, {pipeline_mode = #tpu.pipeline_mode<synchronous>, transform_indices = @transform_2, window_bounds = array<i64: 128, 128>}, {pipeline_mode = #tpu.pipeline_mode<synchronous>, transform_indices = @transform_3, window_bounds = array<i64: 128, 128>}, {pipeline_mode = #tpu.pipeline_mode<synchronous>, transform_indices = @transform_4, window_bounds = array<i64: 128, 128>}, {pipeline_mode = #tpu.pipeline_mode<synchronous>, transform_indices = @transform_5, window_bounds = array<i64: 128, 128>}, {pipeline_mode = #tpu.pipeline_mode<synchronous>, transform_indices = @transform_6, window_bounds = array<i64: 128, 128>}, {pipeline_mode = #tpu.pipeline_mode<synchronous>, transform_indices = @transform_7, window_bounds = array<i64: 128, 128>}, {pipeline_mode = #tpu.pipeline_mode<synchronous>, transform_indices = @transform_8, window_bounds = array<i64: 128, 128>}, {pipeline_mode = #tpu.pipeline_mode<synchronous>, transform_indices = @transform_9, window_bounds = array<i64: 1, 128>}, {pipeline_mode = #tpu.pipeline_mode<synchronous>, transform_indices = @transform_10, window_bounds = array<i64: 1, 128>}, {pipeline_mode = #tpu.pipeline_mode<synchronous>, transform_indices = @transform_11, window_bounds = array<i64: 1, 128>}, {pipeline_mode = #tpu.pipeline_mode<synchronous>, transform_indices = @transform_12, window_bounds = array<i64: 1, 128>}, {pipeline_mode = #tpu.pipeline_mode<synchronous>, transform_indices = @transform_13, window_bounds = array<i64: 1, 128>}, {pipeline_mode = #tpu.pipeline_mode<synchronous>, transform_indices = @transform_14, window_bounds = array<i64: 1, 128>}, {pipeline_mode = #tpu.pipeline_mode<synchronous>, transform_indices = @transform_15, window_bounds = array<i64: 1, 128>}, {pipeline_mode = #tpu.pipeline_mode<synchronous>, transform_indices = @transform_16, window_bounds = array<i64: 1, 128>}, {transform_indices = @transform_17, window_bounds = array<i64: 8, 128>}]} {
    %c0 = arith.constant 0 : index
    %c0_0 = arith.constant 0 : index
    %0 = vector.load %arg1[%c0, %c0_0] : memref<8x128xf32, #tpu.memory_space<vmem>>, vector<8x128xf32>
    %1 = arith.mulf %0, %0 : vector<8x128xf32>
    %cst = arith.constant dense<0.000000e+00> : vector<8xf32>
    %2 = vector.multi_reduction <add>, %1, %cst [1] : vector<8x128xf32> to vector<8xf32>
    %3 = vector.shape_cast %2 : vector<8xf32> to vector<8x1xf32>
    %cst_1 = arith.constant 3.125000e-02 : f32
    %4 = vector.broadcast %cst_1 : f32 to vector<8x1xf32>
    %5 = arith.mulf %3, %4 : vector<8x1xf32>
    %cst_2 = arith.constant 9.99999993E-9 : f32
    %6 = vector.broadcast %cst_2 : f32 to vector<8x1xf32>
    %7 = arith.addf %5, %6 : vector<8x1xf32>
    %8 = math.rsqrt %7 : vector<8x1xf32>
    %9 = vector.broadcast %8 : vector<8x1xf32> to vector<8x128xf32>
    %10 = arith.mulf %0, %9 : vector<8x128xf32>
    %11 = arith.truncf %10 : vector<8x128xf32> to vector<8x128xbf16>
    %c0_3 = arith.constant 0 : index
    %c0_4 = arith.constant 0 : index
    %12 = vector.load %arg2[%c0_3, %c0_4] : memref<128x128xbf16, #tpu.memory_space<vmem>>, vector<128x128xbf16>
    %cst_5 = arith.constant dense<0.000000e+00> : vector<8x128xf32>
    %13 = tpu.matmul %11, %12, %cst_5 {dimension_numbers = #tpu.dot_dimension_numbers<[1], [0], [0], [1], [0, 0, 1, 1], [], []>} : vector<8x128xbf16>, vector<128x128xbf16>, vector<8x128xf32> -> vector<8x128xf32>
    %c0_6 = arith.constant 0 : index
    %c0_7 = arith.constant 0 : index
    %14 = vector.load %arg10[%c0_6, %c0_7] : memref<1x128xf32, #tpu.memory_space<vmem>>, vector<1x128xf32>
    %15 = vector.broadcast %14 : vector<1x128xf32> to vector<8x128xf32>
    %16 = arith.addf %13, %15 : vector<8x128xf32>
    %cst_8 = arith.constant 0.000000e+00 : f32
    %17 = vector.broadcast %cst_8 : f32 to vector<8x128xf32>
    %18 = arith.cmpf oge, %16, %17 : vector<8x128xf32>
    %cst_9 = arith.constant 0.00999999977 : f32
    %19 = vector.broadcast %cst_9 : f32 to vector<8x128xf32>
    %20 = arith.mulf %19, %16 : vector<8x128xf32>
    %21 = arith.select %18, %16, %20 : vector<8x128xi1>, vector<8x128xf32>
    %22 = arith.truncf %21 : vector<8x128xf32> to vector<8x128xbf16>
    %c0_10 = arith.constant 0 : index
    %c0_11 = arith.constant 0 : index
    %23 = vector.load %arg3[%c0_10, %c0_11] : memref<128x128xbf16, #tpu.memory_space<vmem>>, vector<128x128xbf16>
    %cst_12 = arith.constant dense<0.000000e+00> : vector<8x128xf32>
    %24 = tpu.matmul %22, %23, %cst_12 {dimension_numbers = #tpu.dot_dimension_numbers<[1], [0], [0], [1], [0, 0, 1, 1], [], []>} : vector<8x128xbf16>, vector<128x128xbf16>, vector<8x128xf32> -> vector<8x128xf32>
    %c0_13 = arith.constant 0 : index
    %c0_14 = arith.constant 0 : index
    %25 = vector.load %arg11[%c0_13, %c0_14] : memref<1x128xf32, #tpu.memory_space<vmem>>, vector<1x128xf32>
    %26 = vector.broadcast %25 : vector<1x128xf32> to vector<8x128xf32>
    %27 = arith.addf %24, %26 : vector<8x128xf32>
    %cst_15 = arith.constant 0.000000e+00 : f32
    %28 = vector.broadcast %cst_15 : f32 to vector<8x128xf32>
    %29 = arith.cmpf oge, %27, %28 : vector<8x128xf32>
    %cst_16 = arith.constant 2.000000e-01 : f32
    %30 = vector.broadcast %cst_16 : f32 to vector<8x128xf32>
    %31 = arith.mulf %30, %27 : vector<8x128xf32>
    %32 = arith.select %29, %27, %31 : vector<8x128xi1>, vector<8x128xf32>
    %33 = arith.truncf %32 : vector<8x128xf32> to vector<8x128xbf16>
    %c0_17 = arith.constant 0 : index
    %c0_18 = arith.constant 0 : index
    %34 = vector.load %arg4[%c0_17, %c0_18] : memref<128x128xbf16, #tpu.memory_space<vmem>>, vector<128x128xbf16>
    %cst_19 = arith.constant dense<0.000000e+00> : vector<8x128xf32>
    %35 = tpu.matmul %33, %34, %cst_19 {dimension_numbers = #tpu.dot_dimension_numbers<[1], [0], [0], [1], [0, 0, 1, 1], [], []>} : vector<8x128xbf16>, vector<128x128xbf16>, vector<8x128xf32> -> vector<8x128xf32>
    %c0_20 = arith.constant 0 : index
    %c0_21 = arith.constant 0 : index
    %36 = vector.load %arg12[%c0_20, %c0_21] : memref<1x128xf32, #tpu.memory_space<vmem>>, vector<1x128xf32>
    %37 = vector.broadcast %36 : vector<1x128xf32> to vector<8x128xf32>
    %38 = arith.addf %35, %37 : vector<8x128xf32>
    %cst_22 = arith.constant 0.000000e+00 : f32
    %39 = vector.broadcast %cst_22 : f32 to vector<8x128xf32>
    %40 = arith.cmpf oge, %38, %39 : vector<8x128xf32>
    %cst_23 = arith.constant 2.000000e-01 : f32
    %41 = vector.broadcast %cst_23 : f32 to vector<8x128xf32>
    %42 = arith.mulf %41, %38 : vector<8x128xf32>
    %43 = arith.select %40, %38, %42 : vector<8x128xi1>, vector<8x128xf32>
    %44 = arith.truncf %43 : vector<8x128xf32> to vector<8x128xbf16>
    %c0_24 = arith.constant 0 : index
    %c0_25 = arith.constant 0 : index
    %45 = vector.load %arg5[%c0_24, %c0_25] : memref<128x128xbf16, #tpu.memory_space<vmem>>, vector<128x128xbf16>
    %cst_26 = arith.constant dense<0.000000e+00> : vector<8x128xf32>
    %46 = tpu.matmul %44, %45, %cst_26 {dimension_numbers = #tpu.dot_dimension_numbers<[1], [0], [0], [1], [0, 0, 1, 1], [], []>} : vector<8x128xbf16>, vector<128x128xbf16>, vector<8x128xf32> -> vector<8x128xf32>
    %c0_27 = arith.constant 0 : index
    %c0_28 = arith.constant 0 : index
    %47 = vector.load %arg13[%c0_27, %c0_28] : memref<1x128xf32, #tpu.memory_space<vmem>>, vector<1x128xf32>
    %48 = vector.broadcast %47 : vector<1x128xf32> to vector<8x128xf32>
    %49 = arith.addf %46, %48 : vector<8x128xf32>
    %cst_29 = arith.constant 0.000000e+00 : f32
    %50 = vector.broadcast %cst_29 : f32 to vector<8x128xf32>
    %51 = arith.cmpf oge, %49, %50 : vector<8x128xf32>
    %cst_30 = arith.constant 2.000000e-01 : f32
    %52 = vector.broadcast %cst_30 : f32 to vector<8x128xf32>
    %53 = arith.mulf %52, %49 : vector<8x128xf32>
    %54 = arith.select %51, %49, %53 : vector<8x128xi1>, vector<8x128xf32>
    %55 = arith.truncf %54 : vector<8x128xf32> to vector<8x128xbf16>
    %c0_31 = arith.constant 0 : index
    %c0_32 = arith.constant 0 : index
    %56 = vector.load %arg6[%c0_31, %c0_32] : memref<128x128xbf16, #tpu.memory_space<vmem>>, vector<128x128xbf16>
    %cst_33 = arith.constant dense<0.000000e+00> : vector<8x128xf32>
    %57 = tpu.matmul %55, %56, %cst_33 {dimension_numbers = #tpu.dot_dimension_numbers<[1], [0], [0], [1], [0, 0, 1, 1], [], []>} : vector<8x128xbf16>, vector<128x128xbf16>, vector<8x128xf32> -> vector<8x128xf32>
    %c0_34 = arith.constant 0 : index
    %c0_35 = arith.constant 0 : index
    %58 = vector.load %arg14[%c0_34, %c0_35] : memref<1x128xf32, #tpu.memory_space<vmem>>, vector<1x128xf32>
    %59 = vector.broadcast %58 : vector<1x128xf32> to vector<8x128xf32>
    %60 = arith.addf %57, %59 : vector<8x128xf32>
    %cst_36 = arith.constant 0.000000e+00 : f32
    %61 = vector.broadcast %cst_36 : f32 to vector<8x128xf32>
    %62 = arith.cmpf oge, %60, %61 : vector<8x128xf32>
    %cst_37 = arith.constant 2.000000e-01 : f32
    %63 = vector.broadcast %cst_37 : f32 to vector<8x128xf32>
    %64 = arith.mulf %63, %60 : vector<8x128xf32>
    %65 = arith.select %62, %60, %64 : vector<8x128xi1>, vector<8x128xf32>
    %66 = arith.truncf %65 : vector<8x128xf32> to vector<8x128xbf16>
    %c0_38 = arith.constant 0 : index
    %c0_39 = arith.constant 0 : index
    %67 = vector.load %arg7[%c0_38, %c0_39] : memref<128x128xbf16, #tpu.memory_space<vmem>>, vector<128x128xbf16>
    %cst_40 = arith.constant dense<0.000000e+00> : vector<8x128xf32>
    %68 = tpu.matmul %66, %67, %cst_40 {dimension_numbers = #tpu.dot_dimension_numbers<[1], [0], [0], [1], [0, 0, 1, 1], [], []>} : vector<8x128xbf16>, vector<128x128xbf16>, vector<8x128xf32> -> vector<8x128xf32>
    %c0_41 = arith.constant 0 : index
    %c0_42 = arith.constant 0 : index
    %69 = vector.load %arg15[%c0_41, %c0_42] : memref<1x128xf32, #tpu.memory_space<vmem>>, vector<1x128xf32>
    %70 = vector.broadcast %69 : vector<1x128xf32> to vector<8x128xf32>
    %71 = arith.addf %68, %70 : vector<8x128xf32>
    %cst_43 = arith.constant 0.000000e+00 : f32
    %72 = vector.broadcast %cst_43 : f32 to vector<8x128xf32>
    %73 = arith.cmpf oge, %71, %72 : vector<8x128xf32>
    %cst_44 = arith.constant 2.000000e-01 : f32
    %74 = vector.broadcast %cst_44 : f32 to vector<8x128xf32>
    %75 = arith.mulf %74, %71 : vector<8x128xf32>
    %76 = arith.select %73, %71, %75 : vector<8x128xi1>, vector<8x128xf32>
    %77 = arith.truncf %76 : vector<8x128xf32> to vector<8x128xbf16>
    %c0_45 = arith.constant 0 : index
    %c0_46 = arith.constant 0 : index
    %78 = vector.load %arg8[%c0_45, %c0_46] : memref<128x128xbf16, #tpu.memory_space<vmem>>, vector<128x128xbf16>
    %cst_47 = arith.constant dense<0.000000e+00> : vector<8x128xf32>
    %79 = tpu.matmul %77, %78, %cst_47 {dimension_numbers = #tpu.dot_dimension_numbers<[1], [0], [0], [1], [0, 0, 1, 1], [], []>} : vector<8x128xbf16>, vector<128x128xbf16>, vector<8x128xf32> -> vector<8x128xf32>
    %c0_48 = arith.constant 0 : index
    %c0_49 = arith.constant 0 : index
    %80 = vector.load %arg16[%c0_48, %c0_49] : memref<1x128xf32, #tpu.memory_space<vmem>>, vector<1x128xf32>
    %81 = vector.broadcast %80 : vector<1x128xf32> to vector<8x128xf32>
    %82 = arith.addf %79, %81 : vector<8x128xf32>
    %cst_50 = arith.constant 0.000000e+00 : f32
    %83 = vector.broadcast %cst_50 : f32 to vector<8x128xf32>
    %84 = arith.cmpf oge, %82, %83 : vector<8x128xf32>
    %cst_51 = arith.constant 2.000000e-01 : f32
    %85 = vector.broadcast %cst_51 : f32 to vector<8x128xf32>
    %86 = arith.mulf %85, %82 : vector<8x128xf32>
    %87 = arith.select %84, %82, %86 : vector<8x128xi1>, vector<8x128xf32>
    %88 = arith.truncf %87 : vector<8x128xf32> to vector<8x128xbf16>
    %c0_52 = arith.constant 0 : index
    %c0_53 = arith.constant 0 : index
    %89 = vector.load %arg9[%c0_52, %c0_53] : memref<128x128xbf16, #tpu.memory_space<vmem>>, vector<128x128xbf16>
    %cst_54 = arith.constant dense<0.000000e+00> : vector<8x128xf32>
    %90 = tpu.matmul %88, %89, %cst_54 {dimension_numbers = #tpu.dot_dimension_numbers<[1], [0], [0], [1], [0, 0, 1, 1], [], []>} : vector<8x128xbf16>, vector<128x128xbf16>, vector<8x128xf32> -> vector<8x128xf32>
    %c0_55 = arith.constant 0 : index
    %c0_56 = arith.constant 0 : index
    %91 = vector.load %arg17[%c0_55, %c0_56] : memref<1x128xf32, #tpu.memory_space<vmem>>, vector<1x128xf32>
    %92 = vector.broadcast %91 : vector<1x128xf32> to vector<8x128xf32>
    %93 = arith.addf %90, %92 : vector<8x128xf32>
    %c0_57 = arith.constant 0 : index
    %c0_58 = arith.constant 0 : index
    %94 = vector.load %arg18[%c0_57, %c0_58] : memref<8x128xf32, #tpu.memory_space<vmem>>, vector<8x128xf32>
    tpu.vector_store %arg18[%c0_57, %c0_58], %93 {strides = array<i32>} : memref<8x128xf32, #tpu.memory_space<vmem>>, vector<8x128xf32>,
    return
  }
  func.func @transform_0(%arg0: i32) -> (i32, i32) {
    %c0_i32 = arith.constant 0 : i32
    %c0_i32_0 = arith.constant 0 : i32
    return %arg0, %c0_i32 : i32, i32
  }
  func.func @transform_1(%arg0: i32) -> (i32, i32) {
    %c0_i32 = arith.constant 0 : i32
    %c0_i32_0 = arith.constant 0 : i32
    %c0_i32_1 = arith.constant 0 : i32
    return %c0_i32, %c0_i32_0 : i32, i32
  }
  func.func @transform_2(%arg0: i32) -> (i32, i32) {
    %c0_i32 = arith.constant 0 : i32
    %c0_i32_0 = arith.constant 0 : i32
    %c0_i32_1 = arith.constant 0 : i32
    return %c0_i32, %c0_i32_0 : i32, i32
  }
  func.func @transform_3(%arg0: i32) -> (i32, i32) {
    %c0_i32 = arith.constant 0 : i32
    %c0_i32_0 = arith.constant 0 : i32
    %c0_i32_1 = arith.constant 0 : i32
    return %c0_i32, %c0_i32_0 : i32, i32
  }
  func.func @transform_4(%arg0: i32) -> (i32, i32) {
    %c0_i32 = arith.constant 0 : i32
    %c0_i32_0 = arith.constant 0 : i32
    %c0_i32_1 = arith.constant 0 : i32
    return %c0_i32, %c0_i32_0 : i32, i32
  }
  func.func @transform_5(%arg0: i32) -> (i32, i32) {
    %c0_i32 = arith.constant 0 : i32
    %c0_i32_0 = arith.constant 0 : i32
    %c0_i32_1 = arith.constant 0 : i32
    return %c0_i32, %c0_i32_0 : i32, i32
  }
  func.func @transform_6(%arg0: i32) -> (i32, i32) {
    %c0_i32 = arith.constant 0 : i32
    %c0_i32_0 = arith.constant 0 : i32
    %c0_i32_1 = arith.constant 0 : i32
    return %c0_i32, %c0_i32_0 : i32, i32
  }
  func.func @transform_7(%arg0: i32) -> (i32, i32) {
    %c0_i32 = arith.constant 0 : i32
    %c0_i32_0 = arith.constant 0 : i32
    %c0_i32_1 = arith.constant 0 : i32
    return %c0_i32, %c0_i32_0 : i32, i32
  }
  func.func @transform_8(%arg0: i32) -> (i32, i32) {
    %c0_i32 = arith.constant 0 : i32
    %c0_i32_0 = arith.constant 0 : i32
    %c0_i32_1 = arith.constant 0 : i32
    return %c0_i32, %c0_i32_0 : i32, i32
  }
  func.func @transform_9(%arg0: i32) -> (i32, i32) {
    %c0_i32 = arith.constant 0 : i32
    %c0_i32_0 = arith.constant 0 : i32
    %c0_i32_1 = arith.constant 0 : i32
    return %c0_i32, %c0_i32_0 : i32, i32
  }
  func.func @transform_10(%arg0: i32) -> (i32, i32) {
    %c0_i32 = arith.constant 0 : i32
    %c0_i32_0 = arith.constant 0 : i32
    %c0_i32_1 = arith.constant 0 : i32
    return %c0_i32, %c0_i32_0 : i32, i32
  }
  func.func @transform_11(%arg0: i32) -> (i32, i32) {
    %c0_i32 = arith.constant 0 : i32
    %c0_i32_0 = arith.constant 0 : i32
    %c0_i32_1 = arith.constant 0 : i32
    return %c0_i32, %c0_i32_0 : i32, i32
  }
  func.func @transform_12(%arg0: i32) -> (i32, i32) {
    %c0_i32 = arith.constant 0 : i32
    %c0_i32_0 = arith.constant 0 : i32
    %c0_i32_1 = arith.constant 0 : i32
    return %c0_i32, %c0_i32_0 : i32, i32
  }
  func.func @transform_13(%arg0: i32) -> (i32, i32) {
    %c0_i32 = arith.constant 0 : i32
    %c0_i32_0 = arith.constant 0 : i32
    %c0_i32_1 = arith.constant 0 : i32
    return %c0_i32, %c0_i32_0 : i32, i32
  }
  func.func @transform_14(%arg0: i32) -> (i32, i32) {
    %c0_i32 = arith.constant 0 : i32
    %c0_i32_0 = arith.constant 0 : i32
    %c0_i32_1 = arith.constant 0 : i32
    return %c0_i32, %c0_i32_0 : i32, i32
  }
  func.func @transform_15(%arg0: i32) -> (i32, i32) {
    %c0_i32 = arith.constant 0 : i32
    %c0_i32_0 = arith.constant 0 : i32
    %c0_i32_1 = arith.constant 0 : i32
    return %c0_i32, %c0_i32_0 : i32, i32
  }
  func.func @transform_16(%arg0: i32) -> (i32, i32) {
    %c0_i32 = arith.constant 0 : i32
    %c0_i32_0 = arith.constant 0 : i32
    %c0_i32_1 = arith.constant 0 : i32
    return %c0_i32, %c0_i32_0 : i32, i32
  }
  func.func @transform_17(%arg0: i32) -> (i32, i32) {
    %c0_i32 = arith.constant 0 : i32
    %c0_i32_0 = arith.constant 0 : i32
    return %arg0, %c0_i32 : i32, i32
  }
}

module attributes {stable_mosaic.version = 11 : i64} {
  func.func @kernel(%arg0: i32, %arg1: memref<8x128xf32, #tpu.memory_space<vmem>>, %arg2: memref<128x128xbf16, #tpu.memory_space<vmem>>, %arg3: memref<128x128xbf16, #tpu.memory_space<vmem>>, %arg4: memref<128x128xbf16, #tpu.memory_space<vmem>>, %arg5: memref<128x128xbf16, #tpu.memory_space<vmem>>, %arg6: memref<128x128xbf16, #tpu.memory_space<vmem>>, %arg7: memref<128x128xbf16, #tpu.memory_space<vmem>>, %arg8: memref<128x128xbf16, #tpu.memory_space<vmem>>, %arg9: memref<128x128xbf16, #tpu.memory_space<vmem>>, %arg10: memref<1x128xf32, #tpu.memory_space<vmem>>, %arg11: memref<1x128xf32, #tpu.memory_space<vmem>>, %arg12: memref<1x128xf32, #tpu.memory_space<vmem>>, %arg13: memref<1x128xf32, #tpu.memory_space<vmem>>, %arg14: memref<1x128xf32, #tpu.memory_space<vmem>>, %arg15: memref<1x128xf32, #tpu.memory_space<vmem>>, %arg16: memref<1x128xf32, #tpu.memory_space<vmem>>, %arg17: memref<1x128xf32, #tpu.memory_space<vmem>>, %arg18: memref<8x128xf32, #tpu.memory_space<vmem>>) attributes {dimension_semantics = [#tpu.dimension_semantics<parallel>], iteration_bounds = array<i64: 1>, scalar_prefetch = 0 : i64, scratch_operands = 0 : i64, tpu.core_type = #tpu.core_type<tc>, window_params = [{transform_indices = @transform_0, window_bounds = array<i64: 8, 128>}, {pipeline_mode = #tpu.pipeline_mode<synchronous>, transform_indices = @transform_1, window_bounds = array<i64: 128, 128>}, {pipeline_mode = #tpu.pipeline_mode<synchronous>, transform_indices = @transform_2, window_bounds = array<i64: 128, 128>}, {pipeline_mode = #tpu.pipeline_mode<synchronous>, transform_indices = @transform_3, window_bounds = array<i64: 128, 128>}, {pipeline_mode = #tpu.pipeline_mode<synchronous>, transform_indices = @transform_4, window_bounds = array<i64: 128, 128>}, {pipeline_mode = #tpu.pipeline_mode<synchronous>, transform_indices = @transform_5, window_bounds = array<i64: 128, 128>}, {pipeline_mode = #tpu.pipeline_mode<synchronous>, transform_indices = @transform_6, window_bounds = array<i64: 128, 128>}, {pipeline_mode = #tpu.pipeline_mode<synchronous>, transform_indices = @transform_7, window_bounds = array<i64: 128, 128>}, {pipeline_mode = #tpu.pipeline_mode<synchronous>, transform_indices = @transform_8, window_bounds = array<i64: 128, 128>}, {pipeline_mode = #tpu.pipeline_mode<synchronous>, transform_indices = @transform_9, window_bounds = array<i64: 1, 128>}, {pipeline_mode = #tpu.pipeline_mode<synchronous>, transform_indices = @transform_10, window_bounds = array<i64: 1, 128>}, {pipeline_mode = #tpu.pipeline_mode<synchronous>, transform_indices = @transform_11, window_bounds = array<i64: 1, 128>}, {pipeline_mode = #tpu.pipeline_mode<synchronous>, transform_indices = @transform_12, window_bounds = array<i64: 1, 128>}, {pipeline_mode = #tpu.pipeline_mode<synchronous>, transform_indices = @transform_13, window_bounds = array<i64: 1, 128>}, {pipeline_mode = #tpu.pipeline_mode<synchronous>, transform_indices = @transform_14, window_bounds = array<i64: 1, 128>}, {pipeline_mode = #tpu.pipeline_mode<synchronous>, transform_indices = @transform_15, window_bounds = array<i64: 1, 128>}, {pipeline_mode = #tpu.pipeline_mode<synchronous>, transform_indices = @transform_16, window_bounds = array<i64: 1, 128>}, {transform_indices = @transform_17, window_bounds = array<i64: 8, 128>}]} {
    %c0 = arith.constant 0 : index
    %c0_0 = arith.constant 0 : index
    %0 = vector.load %arg1[%c0, %c0_0] : memref<8x128xf32, #tpu.memory_space<vmem>>, vector<8x128xf32>
    %1 = arith.mulf %0, %0 : vector<8x128xf32>
    %cst = arith.constant dense<0.000000e+00> : vector<8xf32>
    %2 = vector.multi_reduction <add>, %1, %cst [1] : vector<8x128xf32> to vector<8xf32>
    %3 = vector.shape_cast %2 : vector<8xf32> to vector<8x1xf32>
    %cst_1 = arith.constant 3.125000e-02 : f32
    %4 = vector.broadcast %cst_1 : f32 to vector<8x1xf32>
    %5 = arith.mulf %3, %4 : vector<8x1xf32>
    %cst_2 = arith.constant 9.99999993E-9 : f32
    %6 = vector.broadcast %cst_2 : f32 to vector<8x1xf32>
    %7 = arith.addf %5, %6 : vector<8x1xf32>
    %8 = math.rsqrt %7 : vector<8x1xf32>
    %9 = vector.broadcast %8 : vector<8x1xf32> to vector<8x128xf32>
    %10 = arith.mulf %0, %9 : vector<8x128xf32>
    %11 = arith.truncf %10 : vector<8x128xf32> to vector<8x128xbf16>
    %c0_3 = arith.constant 0 : index
    %c0_4 = arith.constant 0 : index
    %12 = vector.load %arg2[%c0_3, %c0_4] : memref<128x128xbf16, #tpu.memory_space<vmem>>, vector<128x128xbf16>
    %cst_5 = arith.constant dense<0.000000e+00> : vector<8x128xf32>
    %13 = tpu.matmul %11, %12, %cst_5 {dimension_numbers = #tpu.dot_dimension_numbers<[1], [0], [0], [1], [0, 0, 1, 1], [], []>} : vector<8x128xbf16>, vector<128x128xbf16>, vector<8x128xf32> -> vector<8x128xf32>
    %c0_6 = arith.constant 0 : index
    %c0_7 = arith.constant 0 : index
    %14 = vector.load %arg10[%c0_6, %c0_7] : memref<1x128xf32, #tpu.memory_space<vmem>>, vector<1x128xf32>
    %15 = vector.broadcast %14 : vector<1x128xf32> to vector<8x128xf32>
    %16 = arith.addf %13, %15 : vector<8x128xf32>
    %cst_8 = arith.constant 0.000000e+00 : f32
    %17 = vector.broadcast %cst_8 : f32 to vector<8x128xf32>
    %18 = arith.cmpf oge, %16, %17 : vector<8x128xf32>
    %cst_9 = arith.constant 0.00999999977 : f32
    %19 = vector.broadcast %cst_9 : f32 to vector<8x128xf32>
    %20 = arith.mulf %19, %16 : vector<8x128xf32>
    %21 = arith.select %18, %16, %20 : vector<8x128xi1>, vector<8x128xf32>
    %22 = arith.truncf %21 : vector<8x128xf32> to vector<8x128xbf16>
    %c0_10 = arith.constant 0 : index
    %c0_11 = arith.constant 0 : index
    %23 = vector.load %arg3[%c0_10, %c0_11] : memref<128x128xbf16, #tpu.memory_space<vmem>>, vector<128x128xbf16>
    %cst_12 = arith.constant dense<0.000000e+00> : vector<8x128xf32>
    %24 = tpu.matmul %22, %23, %cst_12 {dimension_numbers = #tpu.dot_dimension_numbers<[1], [0], [0], [1], [0, 0, 1, 1], [], []>} : vector<8x128xbf16>, vector<128x128xbf16>, vector<8x128xf32> -> vector<8x128xf32>
    %c0_13 = arith.constant 0 : index
    %c0_14 = arith.constant 0 : index
    %25 = vector.load %arg11[%c0_13, %c0_14] : memref<1x128xf32, #tpu.memory_space<vmem>>, vector<1x128xf32>
    %26 = vector.broadcast %25 : vector<1x128xf32> to vector<8x128xf32>
    %27 = arith.addf %24, %26 : vector<8x128xf32>
    %cst_15 = arith.constant 0.000000e+00 : f32
    %28 = vector.broadcast %cst_15 : f32 to vector<8x128xf32>
    %29 = arith.cmpf oge, %27, %28 : vector<8x128xf32>
    %cst_16 = arith.constant 2.000000e-01 : f32
    %30 = vector.broadcast %cst_16 : f32 to vector<8x128xf32>
    %31 = arith.mulf %30, %27 : vector<8x128xf32>
    %32 = arith.select %29, %27, %31 : vector<8x128xi1>, vector<8x128xf32>
    %33 = arith.truncf %32 : vector<8x128xf32> to vector<8x128xbf16>
    %c0_17 = arith.constant 0 : index
    %c0_18 = arith.constant 0 : index
    %34 = vector.load %arg4[%c0_17, %c0_18] : memref<128x128xbf16, #tpu.memory_space<vmem>>, vector<128x128xbf16>
    %cst_19 = arith.constant dense<0.000000e+00> : vector<8x128xf32>
    %35 = tpu.matmul %33, %34, %cst_19 {dimension_numbers = #tpu.dot_dimension_numbers<[1], [0], [0], [1], [0, 0, 1, 1], [], []>} : vector<8x128xbf16>, vector<128x128xbf16>, vector<8x128xf32> -> vector<8x128xf32>
    %c0_20 = arith.constant 0 : index
    %c0_21 = arith.constant 0 : index
    %36 = vector.load %arg12[%c0_20, %c0_21] : memref<1x128xf32, #tpu.memory_space<vmem>>, vector<1x128xf32>
    %37 = vector.broadcast %36 : vector<1x128xf32> to vector<8x128xf32>
    %38 = arith.addf %35, %37 : vector<8x128xf32>
    %cst_22 = arith.constant 0.000000e+00 : f32
    %39 = vector.broadcast %cst_22 : f32 to vector<8x128xf32>
    %40 = arith.cmpf oge, %38, %39 : vector<8x128xf32>
    %cst_23 = arith.constant 2.000000e-01 : f32
    %41 = vector.broadcast %cst_23 : f32 to vector<8x128xf32>
    %42 = arith.mulf %41, %38 : vector<8x128xf32>
    %43 = arith.select %40, %38, %42 : vector<8x128xi1>, vector<8x128xf32>
    %44 = arith.truncf %43 : vector<8x128xf32> to vector<8x128xbf16>
    %c0_24 = arith.constant 0 : index
    %c0_25 = arith.constant 0 : index
    %45 = vector.load %arg5[%c0_24, %c0_25] : memref<128x128xbf16, #tpu.memory_space<vmem>>, vector<128x128xbf16>
    %cst_26 = arith.constant dense<0.000000e+00> : vector<8x128xf32>
    %46 = tpu.matmul %44, %45, %cst_26 {dimension_numbers = #tpu.dot_dimension_numbers<[1], [0], [0], [1], [0, 0, 1, 1], [], []>} : vector<8x128xbf16>, vector<128x128xbf16>, vector<8x128xf32> -> vector<8x128xf32>
    %c0_27 = arith.constant 0 : index
    %c0_28 = arith.constant 0 : index
    %47 = vector.load %arg13[%c0_27, %c0_28] : memref<1x128xf32, #tpu.memory_space<vmem>>, vector<1x128xf32>
    %48 = vector.broadcast %47 : vector<1x128xf32> to vector<8x128xf32>
    %49 = arith.addf %46, %48 : vector<8x128xf32>
    %cst_29 = arith.constant 0.000000e+00 : f32
    %50 = vector.broadcast %cst_29 : f32 to vector<8x128xf32>
    %51 = arith.cmpf oge, %49, %50 : vector<8x128xf32>
    %cst_30 = arith.constant 2.000000e-01 : f32
    %52 = vector.broadcast %cst_30 : f32 to vector<8x128xf32>
    %53 = arith.mulf %52, %49 : vector<8x128xf32>
    %54 = arith.select %51, %49, %53 : vector<8x128xi1>, vector<8x128xf32>
    %55 = arith.truncf %54 : vector<8x128xf32> to vector<8x128xbf16>
    %c0_31 = arith.constant 0 : index
    %c0_32 = arith.constant 0 : index
    %56 = vector.load %arg6[%c0_31, %c0_32] : memref<128x128xbf16, #tpu.memory_space<vmem>>, vector<128x128xbf16>
    %cst_33 = arith.constant dense<0.000000e+00> : vector<8x128xf32>
    %57 = tpu.matmul %55, %56, %cst_33 {dimension_numbers = #tpu.dot_dimension_numbers<[1], [0], [0], [1], [0, 0, 1, 1], [], []>} : vector<8x128xbf16>, vector<128x128xbf16>, vector<8x128xf32> -> vector<8x128xf32>
    %c0_34 = arith.constant 0 : index
    %c0_35 = arith.constant 0 : index
    %58 = vector.load %arg14[%c0_34, %c0_35] : memref<1x128xf32, #tpu.memory_space<vmem>>, vector<1x128xf32>
    %59 = vector.broadcast %58 : vector<1x128xf32> to vector<8x128xf32>
    %60 = arith.addf %57, %59 : vector<8x128xf32>
    %cst_36 = arith.constant 0.000000e+00 : f32
    %61 = vector.broadcast %cst_36 : f32 to vector<8x128xf32>
    %62 = arith.cmpf oge, %60, %61 : vector<8x128xf32>
    %cst_37 = arith.constant 2.000000e-01 : f32
    %63 = vector.broadcast %cst_37 : f32 to vector<8x128xf32>
    %64 = arith.mulf %63, %60 : vector<8x128xf32>
    %65 = arith.select %62, %60, %64 : vector<8x128xi1>, vector<8x128xf32>
    %66 = arith.truncf %65 : vector<8x128xf32> to vector<8x128xbf16>
    %c0_38 = arith.constant 0 : index
    %c0_39 = arith.constant 0 : index
    %67 = vector.load %arg7[%c0_38, %c0_39] : memref<128x128xbf16, #tpu.memory_space<vmem>>, vector<128x128xbf16>
    %cst_40 = arith.constant dense<0.000000e+00> : vector<8x128xf32>
    %68 = tpu.matmul %66, %67, %cst_40 {dimension_numbers = #tpu.dot_dimension_numbers<[1], [0], [0], [1], [0, 0, 1, 1], [], []>} : vector<8x128xbf16>, vector<128x128xbf16>, vector<8x128xf32> -> vector<8x128xf32>
    %c0_41 = arith.constant 0 : index
    %c0_42 = arith.constant 0 : index
    %69 = vector.load %arg15[%c0_41, %c0_42] : memref<1x128xf32, #tpu.memory_space<vmem>>, vector<1x128xf32>
    %70 = vector.broadcast %69 : vector<1x128xf32> to vector<8x128xf32>
    %71 = arith.addf %68, %70 : vector<8x128xf32>
    %cst_43 = arith.constant 0.000000e+00 : f32
    %72 = vector.broadcast %cst_43 : f32 to vector<8x128xf32>
    %73 = arith.cmpf oge, %71, %72 : vector<8x128xf32>
    %cst_44 = arith.constant 2.000000e-01 : f32
    %74 = vector.broadcast %cst_44 : f32 to vector<8x128xf32>
    %75 = arith.mulf %74, %71 : vector<8x128xf32>
    %76 = arith.select %73, %71, %75 : vector<8x128xi1>, vector<8x128xf32>
    %77 = arith.truncf %76 : vector<8x128xf32> to vector<8x128xbf16>
    %c0_45 = arith.constant 0 : index
    %c0_46 = arith.constant 0 : index
    %78 = vector.load %arg8[%c0_45, %c0_46] : memref<128x128xbf16, #tpu.memory_space<vmem>>, vector<128x128xbf16>
    %cst_47 = arith.constant dense<0.000000e+00> : vector<8x128xf32>
    %79 = tpu.matmul %77, %78, %cst_47 {dimension_numbers = #tpu.dot_dimension_numbers<[1], [0], [0], [1], [0, 0, 1, 1], [], []>} : vector<8x128xbf16>, vector<128x128xbf16>, vector<8x128xf32> -> vector<8x128xf32>
    %c0_48 = arith.constant 0 : index
    %c0_49 = arith.constant 0 : index
    %80 = vector.load %arg16[%c0_48, %c0_49] : memref<1x128xf32, #tpu.memory_space<vmem>>, vector<1x128xf32>
    %81 = vector.broadcast %80 : vector<1x128xf32> to vector<8x128xf32>
    %82 = arith.addf %79, %81 : vector<8x128xf32>
    %cst_50 = arith.constant 0.000000e+00 : f32
    %83 = vector.broadcast %cst_50 : f32 to vector<8x128xf32>
    %84 = arith.cmpf oge, %82, %83 : vector<8x128xf32>
    %cst_51 = arith.constant 2.000000e-01 : f32
    %85 = vector.broadcast %cst_51 : f32 to vector<8x128xf32>
    %86 = arith.mulf %85, %82 : vector<8x128xf32>
    %87 = arith.select %84, %82, %86 : vector<8x128xi1>, vector<8x128xf32>
    %88 = arith.truncf %87 : vector<8x128xf32> to vector<8x128xbf16>
    %c0_52 = arith.constant 0 : index
    %c0_53 = arith.constant 0 : index
    %89 = vector.load %arg9[%c0_52, %c0_53] : memref<128x128xbf16, #tpu.memory_space<vmem>>, vector<128x128xbf16>
    %cst_54 = arith.constant dense<0.000000e+00> : vector<8x128xf32>
    %90 = tpu.matmul %88, %89, %cst_54 {dimension_numbers = #tpu.dot_dimension_numbers<[1], [0], [0], [1], [0, 0, 1, 1], [], []>} : vector<8x128xbf16>, vector<128x128xbf16>, vector<8x128xf32> -> vector<8x128xf32>
    %c0_55 = arith.constant 0 : index
    %c0_56 = arith.constant 0 : index
    %91 = vector.load %arg17[%c0_55, %c0_56] : memref<1x128xf32, #tpu.memory_space<vmem>>, vector<1x128xf32>
    %92 = vector.broadcast %91 : vector<1x128xf32> to vector<8x128xf32>
    %93 = arith.addf %90, %92 : vector<8x128xf32>
    %c0_57 = arith.constant 0 : index
    %c0_58 = arith.constant 0 : index
    %94 = vector.load %arg18[%c0_57, %c0_58] : memref<8x128xf32, #tpu.memory_space<vmem>>, vector<8x128xf32>
    tpu.vector_store %arg18[%c0_57, %c0_58], %93 {strides = array<i32>} : memref<8x128xf32, #tpu.memory_space<vmem>>, vector<8x128xf32>,
    return
  }
  func.func @transform_0(%arg0: i32) -> (i32, i32) {
    %c0_i32 = arith.constant 0 : i32
    %c0_i32_0 = arith.constant 0 : i32
    return %arg0, %c0_i32 : i32, i32
  }
  func.func @transform_1(%arg0: i32) -> (i32, i32) {
    %c0_i32 = arith.constant 0 : i32
    %c0_i32_0 = arith.constant 0 : i32
    %c0_i32_1 = arith.constant 0 : i32
    return %c0_i32, %c0_i32_0 : i32, i32
  }
  func.func @transform_2(%arg0: i32) -> (i32, i32) {
    %c0_i32 = arith.constant 0 : i32
    %c0_i32_0 = arith.constant 0 : i32
    %c0_i32_1 = arith.constant 0 : i32
    return %c0_i32, %c0_i32_0 : i32, i32
  }
  func.func @transform_3(%arg0: i32) -> (i32, i32) {
    %c0_i32 = arith.constant 0 : i32
    %c0_i32_0 = arith.constant 0 : i32
    %c0_i32_1 = arith.constant 0 : i32
    return %c0_i32, %c0_i32_0 : i32, i32
  }
  func.func @transform_4(%arg0: i32) -> (i32, i32) {
    %c0_i32 = arith.constant 0 : i32
    %c0_i32_0 = arith.constant 0 : i32
    %c0_i32_1 = arith.constant 0 : i32
    return %c0_i32, %c0_i32_0 : i32, i32
  }
  func.func @transform_5(%arg0: i32) -> (i32, i32) {
    %c0_i32 = arith.constant 0 : i32
    %c0_i32_0 = arith.constant 0 : i32
    %c0_i32_1 = arith.constant 0 : i32
    return %c0_i32, %c0_i32_0 : i32, i32
  }
  func.func @transform_6(%arg0: i32) -> (i32, i32) {
    %c0_i32 = arith.constant 0 : i32
    %c0_i32_0 = arith.constant 0 : i32
    %c0_i32_1 = arith.constant 0 : i32
    return %c0_i32, %c0_i32_0 : i32, i32
  }
  func.func @transform_7(%arg0: i32) -> (i32, i32) {
    %c0_i32 = arith.constant 0 : i32
    %c0_i32_0 = arith.constant 0 : i32
    %c0_i32_1 = arith.constant 0 : i32
    return %c0_i32, %c0_i32_0 : i32, i32
  }
  func.func @transform_8(%arg0: i32) -> (i32, i32) {
    %c0_i32 = arith.constant 0 : i32
    %c0_i32_0 = arith.constant 0 : i32
    %c0_i32_1 = arith.constant 0 : i32
    return %c0_i32, %c0_i32_0 : i32, i32
  }
  func.func @transform_9(%arg0: i32) -> (i32, i32) {
    %c0_i32 = arith.constant 0 : i32
    %c0_i32_0 = arith.constant 0 : i32
    %c0_i32_1 = arith.constant 0 : i32
    return %c0_i32, %c0_i32_0 : i32, i32
  }
  func.func @transform_10(%arg0: i32) -> (i32, i32) {
    %c0_i32 = arith.constant 0 : i32
    %c0_i32_0 = arith.constant 0 : i32
    %c0_i32_1 = arith.constant 0 : i32
    return %c0_i32, %c0_i32_0 : i32, i32
  }
  func.func @transform_11(%arg0: i32) -> (i32, i32) {
    %c0_i32 = arith.constant 0 : i32
    %c0_i32_0 = arith.constant 0 : i32
    %c0_i32_1 = arith.constant 0 : i32
    return %c0_i32, %c0_i32_0 : i32, i32
  }
  func.func @transform_12(%arg0: i32) -> (i32, i32) {
    %c0_i32 = arith.constant 0 : i32
    %c0_i32_0 = arith.constant 0 : i32
    %c0_i32_1 = arith.constant 0 : i32
    return %c0_i32, %c0_i32_0 : i32, i32
  }
  func.func @transform_13(%arg0: i32) -> (i32, i32) {
    %c0_i32 = arith.constant 0 : i32
    %c0_i32_0 = arith.constant 0 : i32
    %c0_i32_1 = arith.constant 0 : i32
    return %c0_i32, %c0_i32_0 : i32, i32
  }
  func.func @transform_14(%arg0: i32) -> (i32, i32) {
    %c0_i32 = arith.constant 0 : i32
    %c0_i32_0 = arith.constant 0 : i32
    %c0_i32_1 = arith.constant 0 : i32
    return %c0_i32, %c0_i32_0 : i32, i32
  }
  func.func @transform_15(%arg0: i32) -> (i32, i32) {
    %c0_i32 = arith.constant 0 : i32
    %c0_i32_0 = arith.constant 0 : i32
    %c0_i32_1 = arith.constant 0 : i32
    return %c0_i32, %c0_i32_0 : i32, i32
  }
  func.func @transform_16(%arg0: i32) -> (i32, i32) {
    %c0_i32 = arith.constant 0 : i32
    %c0_i32_0 = arith.constant 0 : i32
    %c0_i32_1 = arith.constant 0 : i32
    return %c0_i32, %c0_i32_0 : i32, i32
  }
  func.func @transform_17(%arg0: i32) -> (i32, i32) {
    %c0_i32 = arith.constant 0 : i32
    %c0_i32_0 = arith.constant 0 : i32
    return %arg0, %c0_i32 : i32, i32
  }
}

</mosaic_0001>

<llo_original>
// kernel: tpu_custom_call.1
$region0: #{tpu_custom_call.1}
  #allocation0 [shape = 'u32[]', space=smem, size = 0x4, offset = 0x4, fixed_abs, tag = 'smem constant byte address 0x4 - core index']
  #allocation1 [shape = 'u32[144,128]{1,0:T(1,128)}', space=vmem, size = 0x12000, scoped, tag = 'internal scratch']
  %s0 = inlined_call_operand.hbm [shape: f32[8,128], index: 0, kind: input, shape index: {}]
  %s1 = inlined_call_operand.hbm [shape: bf16[128,128], index: 1, kind: input, shape index: {}]
  %s2 = inlined_call_operand.hbm [shape: bf16[128,128], index: 2, kind: input, shape index: {}]
  %s3 = inlined_call_operand.hbm [shape: bf16[128,128], index: 3, kind: input, shape index: {}]
  %s4 = inlined_call_operand.hbm [shape: bf16[128,128], index: 4, kind: input, shape index: {}]
  %s5 = inlined_call_operand.hbm [shape: bf16[128,128], index: 5, kind: input, shape index: {}]
  %s6 = inlined_call_operand.hbm [shape: bf16[128,128], index: 6, kind: input, shape index: {}]
  %s7 = inlined_call_operand.hbm [shape: bf16[128,128], index: 7, kind: input, shape index: {}]
  %s8 = inlined_call_operand.hbm [shape: bf16[128,128], index: 8, kind: input, shape index: {}]
  %s9 = inlined_call_operand.hbm [shape: f32[1,128], index: 9, kind: input, shape index: {}]
  %s10 = inlined_call_operand.hbm [shape: f32[1,128], index: 10, kind: input, shape index: {}]
  %s11 = inlined_call_operand.hbm [shape: f32[1,128], index: 11, kind: input, shape index: {}]
  %s12 = inlined_call_operand.hbm [shape: f32[1,128], index: 12, kind: input, shape index: {}]
  %s13 = inlined_call_operand.hbm [shape: f32[1,128], index: 13, kind: input, shape index: {}]
  %s14 = inlined_call_operand.hbm [shape: f32[1,128], index: 14, kind: input, shape index: {}]
  %s15 = inlined_call_operand.hbm [shape: f32[1,128], index: 15, kind: input, shape index: {}]
  %s16 = inlined_call_operand.hbm [shape: f32[1,128], index: 16, kind: input, shape index: {}]
  %s17 = inlined_call_operand.hbm [shape: f32[8,128], index: 17, kind: output, shape index: {}]
  %s18 = sld [smem:[#allocation0]]
  $region146: #{tpu_custom_call.1} parent=0
    _
  %s20 = ssub.s32 1, %s18
  %s21 = scalar_select 0, %s20, %s18
  $region1: #{tpu_custom_call.1} parent=0
    #allocation2 [shape = 'u8[4096]{0}', space=vmem, size = 0x1000, scoped, tag = 'input window, operand 0, single buffered']
    #allocation3 [shape = 's32[1]{0}', space=sflag, size = 0x4, scoped, tag = 'scoped memory for tpu_custom_call.1']
    #allocation4 [shape = 's32[1]{0}', space=sflag, size = 0x4, scoped, tag = 'scoped memory for tpu_custom_call.1']
    #allocation5 [shape = 'u8[32768]{0}', space=vmem, size = 0x8000, scoped, tag = 'input window, operand 1, single buffered']
    #allocation6 [shape = 's32[1]{0}', space=sflag, size = 0x4, scoped, tag = 'scoped memory for tpu_custom_call.1']
    #allocation7 [shape = 'u8[32768]{0}', space=vmem, size = 0x8000, scoped, tag = 'input window, operand 2, single buffered']
    #allocation8 [shape = 'u8[32768]{0}', space=vmem, size = 0x8000, scoped, tag = 'input window, operand 3, single buffered']
    #allocation9 [shape = 's32[1]{0}', space=sflag, size = 0x4, scoped, tag = 'scoped memory for tpu_custom_call.1']
    #allocation10 [shape = 'u8[32768]{0}', space=vmem, size = 0x8000, scoped, tag = 'input window, operand 4, single buffered']
    #allocation11 [shape = 'u8[32768]{0}', space=vmem, size = 0x8000, scoped, tag = 'input window, operand 5, single buffered']
    #allocation12 [shape = 's32[1]{0}', space=sflag, size = 0x4, scoped, tag = 'scoped memory for tpu_custom_call.1']
    #allocation13 [shape = 'u8[32768]{0}', space=vmem, size = 0x8000, scoped, tag = 'input window, operand 6, single buffered']
    #allocation14 [shape = 'u8[32768]{0}', space=vmem, size = 0x8000, scoped, tag = 'input window, operand 7, single buffered']
    #allocation15 [shape = 's32[1]{0}', space=sflag, size = 0x4, scoped, tag = 'scoped memory for tpu_custom_call.1']
    #allocation16 [shape = 'u8[32768]{0}', space=vmem, size = 0x8000, scoped, tag = 'input window, operand 8, single buffered']
    #allocation17 [shape = 'u8[512]{0}', space=vmem, size = 0x400, scoped, tag = 'input window, operand 9, single buffered']
    #allocation18 [shape = 's32[1]{0}', space=sflag, size = 0x4, scoped, tag = 'scoped memory for tpu_custom_call.1']
    #allocation19 [shape = 'u8[512]{0}', space=vmem, size = 0x400, scoped, tag = 'input window, operand 10, single buffered']
    #allocation20 [shape = 'u8[512]{0}', space=vmem, size = 0x400, scoped, tag = 'input window, operand 11, single buffered']
    #allocation21 [shape = 's32[1]{0}', space=sflag, size = 0x4, scoped, tag = 'scoped memory for tpu_custom_call.1']
    #allocation22 [shape = 'u8[512]{0}', space=vmem, size = 0x400, scoped, tag = 'input window, operand 12, single buffered']
    #allocation23 [shape = 'u8[512]{0}', space=vmem, size = 0x400, scoped, tag = 'input window, operand 13, single buffered']
    #allocation24 [shape = 's32[1]{0}', space=sflag, size = 0x4, scoped, tag = 'scoped memory for tpu_custom_call.1']
    #allocation25 [shape = 'u8[512]{0}', space=vmem, size = 0x400, scoped, tag = 'input window, operand 14, single buffered']
    #allocation26 [shape = 'u8[512]{0}', space=vmem, size = 0x400, scoped, tag = 'input window, operand 15, single buffered']
    #allocation27 [shape = 's32[1]{0}', space=sflag, size = 0x4, scoped, tag = 'scoped memory for tpu_custom_call.1']
    #allocation28 [shape = 'u8[512]{0}', space=vmem, size = 0x400, scoped, tag = 'input window, operand 16, single buffered']
    #allocation29 [shape = 'u8[4096]{0}', space=vmem, size = 0x1000, scoped, tag = 'output window, operand 0, single buffered']
    %22 = vsyncpa [#allocation3], 0
    %23 = vsyncpa [#allocation6], 0
    %24 = vsyncpa [#allocation9], 0
    %25 = vsyncpa [#allocation12], 0
    %26 = vsyncpa [#allocation15], 0
    %27 = vsyncpa [#allocation18], 0
    %28 = vsyncpa [#allocation21], 0
    %29 = vsyncpa [#allocation24], 0
    %30 = vsyncpa [#allocation27], 0
    %31 = vsyncpa [#allocation4], 0
    // Predicated region
    $region2: #{tpu_custom_call.1} parent=1 // pred_check
      _
    $region3: #{tpu_custom_call.1} parent=1 // pred_check_branch
      %33 = sbr.rel (0) target = $region5
    $region4: #{tpu_custom_call.1} parent=1 // pred_region
      %s35 = ssub.s32 128, 128
      %36 = vsyncadd [#allocation3], %s35
      %s38 = sshll.u32 [#allocation2], 4
      %s39 = int_to_ptr.vmem [resolvable:$true] %s38
      %41 = dma.hbm_to_vmem [thread:$0]  %s0, 128, %s39, [#allocation3]
    $region5: #{tpu_custom_call.1} parent=1 // pred_fallthru
      _
    // Predicated region
    $region6: #{tpu_custom_call.1} parent=1 // pred_check
      _
    $region7: #{tpu_custom_call.1} parent=1 // pred_check_branch
      %43 = sbr.rel (0) target = $region9
    $region8: #{tpu_custom_call.1} parent=1 // pred_region
      %s45 = ssub.s32 1024, 1024
      %46 = vsyncadd [#allocation6], %s45
      %s47 = sshll.u32 [#allocation5], 4
      %s48 = int_to_ptr.vmem [resolvable:$true] %s47
      %53 = dma.hbm_to_vmem [thread:$0]  %s1, 1024, %s48, [#allocation6], 64, 64, 4
    $region9: #{tpu_custom_call.1} parent=1 // pred_fallthru
      _
    // Predicated region
    $region10: #{tpu_custom_call.1} parent=1 // pred_check
      _
    $region11: #{tpu_custom_call.1} parent=1 // pred_check_branch
      %55 = sbr.rel (0) target = $region13
    $region12: #{tpu_custom_call.1} parent=1 // pred_region
      %s57 = ssub.s32 1024, 1024
      %58 = vsyncadd [#allocation6], %s57
      %s59 = sshll.u32 [#allocation7], 4
      %s60 = int_to_ptr.vmem [resolvable:$true] %s59
      %65 = dma.hbm_to_vmem [thread:$0]  %s2, 1024, %s60, [#allocation6], 64, 64, 4
    $region13: #{tpu_custom_call.1} parent=1 // pred_fallthru
      _
    // Predicated region
    $region14: #{tpu_custom_call.1} parent=1 // pred_check
      _
    $region15: #{tpu_custom_call.1} parent=1 // pred_check_branch
      %67 = sbr.rel (0) target = $region17
    $region16: #{tpu_custom_call.1} parent=1 // pred_region
      %s69 = ssub.s32 1024, 1024
      %70 = vsyncadd [#allocation9], %s69
      %s71 = sshll.u32 [#allocation8], 4
      %s72 = int_to_ptr.vmem [resolvable:$true] %s71
      %77 = dma.hbm_to_vmem [thread:$0]  %s3, 1024, %s72, [#allocation9], 64, 64, 4
    $region17: #{tpu_custom_call.1} parent=1 // pred_fallthru
      _
    // Predicated region
    $region18: #{tpu_custom_call.1} parent=1 // pred_check
      _
    $region19: #{tpu_custom_call.1} parent=1 // pred_check_branch
      %79 = sbr.rel (0) target = $region21
    $region20: #{tpu_custom_call.1} parent=1 // pred_region
      %s81 = ssub.s32 1024, 1024
      %82 = vsyncadd [#allocation9], %s81
      %s83 = sshll.u32 [#allocation10], 4
      %s84 = int_to_ptr.vmem [resolvable:$true] %s83
      %89 = dma.hbm_to_vmem [thread:$0]  %s4, 1024, %s84, [#allocation9], 64, 64, 4
    $region21: #{tpu_custom_call.1} parent=1 // pred_fallthru
      _
    // Predicated region
    $region22: #{tpu_custom_call.1} parent=1 // pred_check
      _
    $region23: #{tpu_custom_call.1} parent=1 // pred_check_branch
      %91 = sbr.rel (0) target = $region25
    $region24: #{tpu_custom_call.1} parent=1 // pred_region
      %s93 = ssub.s32 1024, 1024
      %94 = vsyncadd [#allocation12], %s93
      %s95 = sshll.u32 [#allocation11], 4
      %s96 = int_to_ptr.vmem [resolvable:$true] %s95
      %101 = dma.hbm_to_vmem [thread:$0]  %s5, 1024, %s96, [#allocation12], 64, 64, 4
    $region25: #{tpu_custom_call.1} parent=1 // pred_fallthru
      _
    // Predicated region
    $region26: #{tpu_custom_call.1} parent=1 // pred_check
      _
    $region27: #{tpu_custom_call.1} parent=1 // pred_check_branch
      %103 = sbr.rel (0) target = $region29
    $region28: #{tpu_custom_call.1} parent=1 // pred_region
      %s105 = ssub.s32 1024, 1024
      %106 = vsyncadd [#allocation12], %s105
      %s107 = sshll.u32 [#allocation13], 4
      %s108 = int_to_ptr.vmem [resolvable:$true] %s107
      %113 = dma.hbm_to_vmem [thread:$0]  %s6, 1024, %s108, [#allocation12], 64, 64, 4
    $region29: #{tpu_custom_call.1} parent=1 // pred_fallthru
      _
    // Predicated region
    $region30: #{tpu_custom_call.1} parent=1 // pred_check
      _
    $region31: #{tpu_custom_call.1} parent=1 // pred_check_branch
      %115 = sbr.rel (0) target = $region33
    $region32: #{tpu_custom_call.1} parent=1 // pred_region
      %s117 = ssub.s32 1024, 1024
      %118 = vsyncadd [#allocation15], %s117
      %s119 = sshll.u32 [#allocation14], 4
      %s120 = int_to_ptr.vmem [resolvable:$true] %s119
      %125 = dma.hbm_to_vmem [thread:$0]  %s7, 1024, %s120, [#allocation15], 64, 64, 4
    $region33: #{tpu_custom_call.1} parent=1 // pred_fallthru
      _
    // Predicated region
    $region34: #{tpu_custom_call.1} parent=1 // pred_check
      _
    $region35: #{tpu_custom_call.1} parent=1 // pred_check_branch
      %127 = sbr.rel (0) target = $region37
    $region36: #{tpu_custom_call.1} parent=1 // pred_region
      %s129 = ssub.s32 1024, 1024
      %130 = vsyncadd [#allocation15], %s129
      %s131 = sshll.u32 [#allocation16], 4
      %s132 = int_to_ptr.vmem [resolvable:$true] %s131
      %137 = dma.hbm_to_vmem [thread:$0]  %s8, 1024, %s132, [#allocation15], 64, 64, 4
    $region37: #{tpu_custom_call.1} parent=1 // pred_fallthru
      _
    // Predicated region
    $region38: #{tpu_custom_call.1} parent=1 // pred_check
      _
    $region39: #{tpu_custom_call.1} parent=1 // pred_check_branch
      %139 = sbr.rel (0) target = $region41
    $region40: #{tpu_custom_call.1} parent=1 // pred_region
      %s141 = ssub.s32 16, 16
      %142 = vsyncadd [#allocation18], %s141
      %s144 = sshll.u32 [#allocation17], 4
      %s145 = int_to_ptr.vmem [resolvable:$true] %s144
      %147 = dma.hbm_to_vmem [thread:$0]  %s9, 16, %s145, [#allocation18]
    $region41: #{tpu_custom_call.1} parent=1 // pred_fallthru
      _
    // Predicated region
    $region42: #{tpu_custom_call.1} parent=1 // pred_check
      _
    $region43: #{tpu_custom_call.1} parent=1 // pred_check_branch
      %149 = sbr.rel (0) target = $region45
    $region44: #{tpu_custom_call.1} parent=1 // pred_region
      %s151 = ssub.s32 16, 16
      %152 = vsyncadd [#allocation18], %s151
      %s154 = sshll.u32 [#allocation19], 4
      %s155 = int_to_ptr.vmem [resolvable:$true] %s154
      %157 = dma.hbm_to_vmem [thread:$0]  %s10, 16, %s155, [#allocation18]
    $region45: #{tpu_custom_call.1} parent=1 // pred_fallthru
      _
    // Predicated region
    $region46: #{tpu_custom_call.1} parent=1 // pred_check
      _
    $region47: #{tpu_custom_call.1} parent=1 // pred_check_branch
      %159 = sbr.rel (0) target = $region49
    $region48: #{tpu_custom_call.1} parent=1 // pred_region
      %s161 = ssub.s32 16, 16
      %162 = vsyncadd [#allocation21], %s161
      %s164 = sshll.u32 [#allocation20], 4
      %s165 = int_to_ptr.vmem [resolvable:$true] %s164
      %167 = dma.hbm_to_vmem [thread:$0]  %s11, 16, %s165, [#allocation21]
    $region49: #{tpu_custom_call.1} parent=1 // pred_fallthru
      _
    // Predicated region
    $region50: #{tpu_custom_call.1} parent=1 // pred_check
      _
    $region51: #{tpu_custom_call.1} parent=1 // pred_check_branch
      %169 = sbr.rel (0) target = $region53
    $region52: #{tpu_custom_call.1} parent=1 // pred_region
      %s171 = ssub.s32 16, 16
      %172 = vsyncadd [#allocation21], %s171
      %s174 = sshll.u32 [#allocation22], 4
      %s175 = int_to_ptr.vmem [resolvable:$true] %s174
      %177 = dma.hbm_to_vmem [thread:$0]  %s12, 16, %s175, [#allocation21]
    $region53: #{tpu_custom_call.1} parent=1 // pred_fallthru
      _
    // Predicated region
    $region54: #{tpu_custom_call.1} parent=1 // pred_check
      _
    $region55: #{tpu_custom_call.1} parent=1 // pred_check_branch
      %179 = sbr.rel (0) target = $region57
    $region56: #{tpu_custom_call.1} parent=1 // pred_region
      %s181 = ssub.s32 16, 16
      %182 = vsyncadd [#allocation24], %s181
      %s184 = sshll.u32 [#allocation23], 4
      %s185 = int_to_ptr.vmem [resolvable:$true] %s184
      %187 = dma.hbm_to_vmem [thread:$0]  %s13, 16, %s185, [#allocation24]
    $region57: #{tpu_custom_call.1} parent=1 // pred_fallthru
      _
    // Predicated region
    $region58: #{tpu_custom_call.1} parent=1 // pred_check
      _
    $region59: #{tpu_custom_call.1} parent=1 // pred_check_branch
      %189 = sbr.rel (0) target = $region61
    $region60: #{tpu_custom_call.1} parent=1 // pred_region
      %s191 = ssub.s32 16, 16
      %192 = vsyncadd [#allocation24], %s191
      %s194 = sshll.u32 [#allocation25], 4
      %s195 = int_to_ptr.vmem [resolvable:$true] %s194
      %197 = dma.hbm_to_vmem [thread:$0]  %s14, 16, %s195, [#allocation24]
    $region61: #{tpu_custom_call.1} parent=1 // pred_fallthru
      _
    // Predicated region
    $region62: #{tpu_custom_call.1} parent=1 // pred_check
      _
    $region63: #{tpu_custom_call.1} parent=1 // pred_check_branch
      %199 = sbr.rel (0) target = $region65
    $region64: #{tpu_custom_call.1} parent=1 // pred_region
      %s201 = ssub.s32 16, 16
      %202 = vsyncadd [#allocation27], %s201
      %s204 = sshll.u32 [#allocation26], 4
      %s205 = int_to_ptr.vmem [resolvable:$true] %s204
      %207 = dma.hbm_to_vmem [thread:$0]  %s15, 16, %s205, [#allocation27]
    $region65: #{tpu_custom_call.1} parent=1 // pred_fallthru
      _
    // Predicated region
    $region66: #{tpu_custom_call.1} parent=1 // pred_check
      _
    $region67: #{tpu_custom_call.1} parent=1 // pred_check_branch
      %209 = sbr.rel (0) target = $region69
    $region68: #{tpu_custom_call.1} parent=1 // pred_region
      %s211 = ssub.s32 16, 16
      %212 = vsyncadd [#allocation27], %s211
      %s214 = sshll.u32 [#allocation28], 4
      %s215 = int_to_ptr.vmem [resolvable:$true] %s214
      %217 = dma.hbm_to_vmem [thread:$0]  %s16, 16, %s215, [#allocation27]
    $region69: #{tpu_custom_call.1} parent=1 // pred_fallthru
      _
    // Predicated region
    $region70: #{tpu_custom_call.1} parent=1 // pred_check
      _
    $region71: #{tpu_custom_call.1} parent=1 // pred_check_branch
      %219 = sbr.rel (0) target = $region73
    $region72: #{tpu_custom_call.1} parent=1 // pred_region
      %220 = dma.done [#allocation3], 128
    $region73: #{tpu_custom_call.1} parent=1 // pred_fallthru
      _
    // Predicated region
    $region74: #{tpu_custom_call.1} parent=1 // pred_check
      _
    $region75: #{tpu_custom_call.1} parent=1 // pred_check_branch
      %222 = sbr.rel (0) target = $region77
    $region76: #{tpu_custom_call.1} parent=1 // pred_region
      %223 = dma.done [#allocation6], 1024
    $region77: #{tpu_custom_call.1} parent=1 // pred_fallthru
      _
    // Predicated region
    $region78: #{tpu_custom_call.1} parent=1 // pred_check
      _
    $region79: #{tpu_custom_call.1} parent=1 // pred_check_branch
      %225 = sbr.rel (0) target = $region81
    $region80: #{tpu_custom_call.1} parent=1 // pred_region
      %226 = dma.done [#allocation6], 1024
    $region81: #{tpu_custom_call.1} parent=1 // pred_fallthru
      _
    // Predicated region
    $region82: #{tpu_custom_call.1} parent=1 // pred_check
      _
    $region83: #{tpu_custom_call.1} parent=1 // pred_check_branch
      %228 = sbr.rel (0) target = $region85
    $region84: #{tpu_custom_call.1} parent=1 // pred_region
      %229 = dma.done [#allocation9], 1024
    $region85: #{tpu_custom_call.1} parent=1 // pred_fallthru
      _
    // Predicated region
    $region86: #{tpu_custom_call.1} parent=1 // pred_check
      _
    $region87: #{tpu_custom_call.1} parent=1 // pred_check_branch
      %231 = sbr.rel (0) target = $region89
    $region88: #{tpu_custom_call.1} parent=1 // pred_region
      %232 = dma.done [#allocation9], 1024
    $region89: #{tpu_custom_call.1} parent=1 // pred_fallthru
      _
    // Predicated region
    $region90: #{tpu_custom_call.1} parent=1 // pred_check
      _
    $region91: #{tpu_custom_call.1} parent=1 // pred_check_branch
      %234 = sbr.rel (0) target = $region93
    $region92: #{tpu_custom_call.1} parent=1 // pred_region
      %235 = dma.done [#allocation12], 1024
    $region93: #{tpu_custom_call.1} parent=1 // pred_fallthru
      _
    // Predicated region
    $region94: #{tpu_custom_call.1} parent=1 // pred_check
      _
    $region95: #{tpu_custom_call.1} parent=1 // pred_check_branch
      %237 = sbr.rel (0) target = $region97
    $region96: #{tpu_custom_call.1} parent=1 // pred_region
      %238 = dma.done [#allocation12], 1024
    $region97: #{tpu_custom_call.1} parent=1 // pred_fallthru
      _
    // Predicated region
    $region98: #{tpu_custom_call.1} parent=1 // pred_check
      _
    $region99: #{tpu_custom_call.1} parent=1 // pred_check_branch
      %240 = sbr.rel (0) target = $region101
    $region100: #{tpu_custom_call.1} parent=1 // pred_region
      %241 = dma.done [#allocation15], 1024
    $region101: #{tpu_custom_call.1} parent=1 // pred_fallthru
      _
    // Predicated region
    $region102: #{tpu_custom_call.1} parent=1 // pred_check
      _
    $region103: #{tpu_custom_call.1} parent=1 // pred_check_branch
      %243 = sbr.rel (0) target = $region105
    $region104: #{tpu_custom_call.1} parent=1 // pred_region
      %244 = dma.done [#allocation15], 1024
    $region105: #{tpu_custom_call.1} parent=1 // pred_fallthru
      _
    // Predicated region
    $region106: #{tpu_custom_call.1} parent=1 // pred_check
      _
    $region107: #{tpu_custom_call.1} parent=1 // pred_check_branch
      %246 = sbr.rel (0) target = $region109
    $region108: #{tpu_custom_call.1} parent=1 // pred_region
      %247 = dma.done [#allocation18], 16
    $region109: #{tpu_custom_call.1} parent=1 // pred_fallthru
      _
    // Predicated region
    $region110: #{tpu_custom_call.1} parent=1 // pred_check
      _
    $region111: #{tpu_custom_call.1} parent=1 // pred_check_branch
      %249 = sbr.rel (0) target = $region113
    $region112: #{tpu_custom_call.1} parent=1 // pred_region
      %250 = dma.done [#allocation18], 16
    $region113: #{tpu_custom_call.1} parent=1 // pred_fallthru
      _
    // Predicated region
    $region114: #{tpu_custom_call.1} parent=1 // pred_check
      _
    $region115: #{tpu_custom_call.1} parent=1 // pred_check_branch
      %252 = sbr.rel (0) target = $region117
    $region116: #{tpu_custom_call.1} parent=1 // pred_region
      %253 = dma.done [#allocation21], 16
    $region117: #{tpu_custom_call.1} parent=1 // pred_fallthru
      _
    // Predicated region
    $region118: #{tpu_custom_call.1} parent=1 // pred_check
      _
    $region119: #{tpu_custom_call.1} parent=1 // pred_check_branch
      %255 = sbr.rel (0) target = $region121
    $region120: #{tpu_custom_call.1} parent=1 // pred_region
      %256 = dma.done [#allocation21], 16
    $region121: #{tpu_custom_call.1} parent=1 // pred_fallthru
      _
    // Predicated region
    $region122: #{tpu_custom_call.1} parent=1 // pred_check
      _
    $region123: #{tpu_custom_call.1} parent=1 // pred_check_branch
      %258 = sbr.rel (0) target = $region125
    $region124: #{tpu_custom_call.1} parent=1 // pred_region
      %259 = dma.done [#allocation24], 16
    $region125: #{tpu_custom_call.1} parent=1 // pred_fallthru
      _
    // Predicated region
    $region126: #{tpu_custom_call.1} parent=1 // pred_check
      _
    $region127: #{tpu_custom_call.1} parent=1 // pred_check_branch
      %261 = sbr.rel (0) target = $region129
    $region128: #{tpu_custom_call.1} parent=1 // pred_region
      %262 = dma.done [#allocation24], 16
    $region129: #{tpu_custom_call.1} parent=1 // pred_fallthru
      _
    // Predicated region
    $region130: #{tpu_custom_call.1} parent=1 // pred_check
      _
    $region131: #{tpu_custom_call.1} parent=1 // pred_check_branch
      %264 = sbr.rel (0) target = $region133
    $region132: #{tpu_custom_call.1} parent=1 // pred_region
      %265 = dma.done [#allocation27], 16
    $region133: #{tpu_custom_call.1} parent=1 // pred_fallthru
      _
    // Predicated region
    $region134: #{tpu_custom_call.1} parent=1 // pred_check
      _
    $region135: #{tpu_custom_call.1} parent=1 // pred_check_branch
      %267 = sbr.rel (0) target = $region137
    $region136: #{tpu_custom_call.1} parent=1 // pred_region
      %268 = dma.done [#allocation27], 16
    $region137: #{tpu_custom_call.1} parent=1 // pred_fallthru
      _
    %v270 = vld [vmem:[#allocation2] sm:$0xff]
    %v271 = vmul.f32 %v270, %v270
    %272 = vadd.xlane.f32.xlu0 %v271
    %v273 = vpop.xlane.xlu0 %272
    %v274 = vmul.f32 %v273, 0.03125
    %v275 = vadd.f32 %v274, 1e-08
    %v276 = vrsqrt.pop %v275
    %v277 = vmul.f32 %v270, %v276
    %v278 = vpack.c.bf16 %v277, %v277
    %v279 = vld [vmem:[#allocation5] sm:$0xf]
    %v280 = vld [vmem:[#allocation5 + $0x4] sm:$0xf]
    %v281 = vld [vmem:[#allocation5 + $0x8] sm:$0xf]
    %v282 = vld [vmem:[#allocation5 + $0xc] sm:$0xf]
    %v283 = vld [vmem:[#allocation5 + $0x10] sm:$0xf]
    %v284 = vld [vmem:[#allocation5 + $0x14] sm:$0xf]
    %v285 = vld [vmem:[#allocation5 + $0x18] sm:$0xf]
    %v286 = vld [vmem:[#allocation5 + $0x1c] sm:$0xf]
    %v287 = vld [vmem:[#allocation5 + $0x20] sm:$0xf]
    %v288 = vld [vmem:[#allocation5 + $0x24] sm:$0xf]
    %v289 = vld [vmem:[#allocation5 + $0x28] sm:$0xf]
    %v290 = vld [vmem:[#allocation5 + $0x2c] sm:$0xf]
    %v291 = vld [vmem:[#allocation5 + $0x30] sm:$0xf]
    %v292 = vld [vmem:[#allocation5 + $0x34] sm:$0xf]
    %v293 = vld [vmem:[#allocation5 + $0x38] sm:$0xf]
    %v294 = vld [vmem:[#allocation5 + $0x3c] sm:$0xf]
    %v295 = vld [vmem:[#allocation17] sm:$0x1]
    %v297 = vlaneseq
    %v298 = vshrl.u32 %v297, 7
    %v299 = vsub.s32 0, %v298
    %v300 = vrot.slane %v295, %v299
    %v318 = vunpack.c.l.b16 %v279
    %v319 = vunpack.c.l.b16 %v280
    %v320 = vunpack.c.l.b16 %v281
    %v321 = vunpack.c.l.b16 %v282
    %v322 = vunpack.c.l.b16 %v283
    %v323 = vunpack.c.l.b16 %v284
    %v324 = vunpack.c.l.b16 %v285
    %v325 = vunpack.c.l.b16 %v286
    %v326 = vunpack.c.l.b16 %v287
    %v327 = vunpack.c.l.b16 %v288
    %v328 = vunpack.c.l.b16 %v289
    %v329 = vunpack.c.l.b16 %v290
    %v330 = vunpack.c.l.b16 %v291
    %v331 = vunpack.c.l.b16 %v292
    %v332 = vunpack.c.l.b16 %v293
    %v333 = vunpack.c.l.b16 %v294
    %v334 = vpack.c.b16 %v319, %v318
    %v335 = vpack.c.b16 %v321, %v320
    %v336 = vpack.c.b16 %v323, %v322
    %v337 = vpack.c.b16 %v325, %v324
    %v338 = vpack.c.b16 %v327, %v326
    %v339 = vpack.c.b16 %v329, %v328
    %v340 = vpack.c.b16 %v331, %v330
    %v341 = vpack.c.b16 %v333, %v332
    %350 = vmatprep.subr.bf16.mxu0 0
    %351 = vmatpush1.bf16.msra.mxu0 %v334
    %352 = vmatprep.subr.bf16.mxu0 0
    %353 = vmatpush1.bf16.msra.mxu0 %v335
    %354 = vmatprep.subr.bf16.mxu0 0
    %355 = vmatpush1.bf16.msra.mxu0 %v336
    %356 = vmatprep.subr.bf16.mxu0 0
    %357 = vmatpush1.bf16.msra.mxu0 %v337
    %358 = vmatprep.subr.bf16.mxu0 0
    %359 = vmatpush1.bf16.msra.mxu0 %v338
    %360 = vmatprep.subr.bf16.mxu0 0
    %361 = vmatpush1.bf16.msra.mxu0 %v339
    %362 = vmatprep.subr.bf16.mxu0 0
    %363 = vmatpush1.bf16.msra.mxu0 %v340
    %364 = vmatprep.subr.bf16.mxu0 0
    %365 = vmatpush1.bf16.msra.mxu0 %v341
    %366 = vmatprep.subr.bf16.mxu0 0
    %367 = vmatpush1.bf16.msra.mxu0 0
    %368 = vmatprep.subr.bf16.mxu0 0
    %369 = vmatpush1.bf16.msra.mxu0 0
    %370 = vmatprep.subr.bf16.mxu0 0
    %371 = vmatpush1.bf16.msra.mxu0 0
    %372 = vmatprep.subr.bf16.mxu0 0
    %373 = vmatpush1.bf16.msra.mxu0 0
    %374 = vmatprep.subr.bf16.mxu0 0
    %375 = vmatpush1.bf16.msra.mxu0 0
    %376 = vmatprep.subr.bf16.mxu0 0
    %377 = vmatpush1.bf16.msra.mxu0 0
    %378 = vmatprep.subr.bf16.mxu0 0
    %379 = vmatpush1.bf16.msra.mxu0 0
    %380 = vmatprep.subr.bf16.mxu0 0
    %381 = vmatpush1.bf16.msra.mxu0 0
    %382 = vmatprep.mubr.bf16.mxu0 0
    %383 = vmatmul.mubr.bf16.gmra.mrb[0].mxu0 %v278
    %v384 = vpop.f32.mrb[0].mxu0
    %v385 = vadd.f32 %v300, %v384
    %v386 = vpop.f32.mrb[0].mxu0
    %v387 = vpop.f32.mrb[0].mxu0
    %v388 = vpop.f32.mrb[0].mxu0
    %389 = vdwg.mxu0
    %vm390 = vcmp.ge.f32.partialorder %v385, 0.0
    %v391 = vmul.f32 %v385, 0.01
    %v392 = vsel %vm390, %v385, %v391
    %v393 = vpack.c.bf16 %v392, %v392
    %v394 = vld [vmem:[#allocation7] sm:$0xf]
    %v395 = vld [vmem:[#allocation7 + $0x4] sm:$0xf]
    %v396 = vld [vmem:[#allocation7 + $0x8] sm:$0xf]
    %v397 = vld [vmem:[#allocation7 + $0xc] sm:$0xf]
    %v398 = vld [vmem:[#allocation7 + $0x10] sm:$0xf]
    %v399 = vld [vmem:[#allocation7 + $0x14] sm:$0xf]
    %v400 = vld [vmem:[#allocation7 + $0x18] sm:$0xf]
    %v401 = vld [vmem:[#allocation7 + $0x1c] sm:$0xf]
    %v402 = vld [vmem:[#allocation7 + $0x20] sm:$0xf]
    %v403 = vld [vmem:[#allocation7 + $0x24] sm:$0xf]
    %v404 = vld [vmem:[#allocation7 + $0x28] sm:$0xf]
    %v405 = vld [vmem:[#allocation7 + $0x2c] sm:$0xf]
    %v406 = vld [vmem:[#allocation7 + $0x30] sm:$0xf]
    %v407 = vld [vmem:[#allocation7 + $0x34] sm:$0xf]
    %v408 = vld [vmem:[#allocation7 + $0x38] sm:$0xf]
    %v409 = vld [vmem:[#allocation7 + $0x3c] sm:$0xf]
    %v410 = vld [vmem:[#allocation19] sm:$0x1]
    %v412 = vlaneseq
    %v413 = vshrl.u32 %v412, 7
    %v414 = vsub.s32 0, %v413
    %v415 = vrot.slane %v410, %v414
    %v433 = vunpack.c.l.b16 %v394
    %v434 = vunpack.c.l.b16 %v395
    %v435 = vunpack.c.l.b16 %v396
    %v436 = vunpack.c.l.b16 %v397
    %v437 = vunpack.c.l.b16 %v398
    %v438 = vunpack.c.l.b16 %v399
    %v439 = vunpack.c.l.b16 %v400
    %v440 = vunpack.c.l.b16 %v401
    %v441 = vunpack.c.l.b16 %v402
    %v442 = vunpack.c.l.b16 %v403
    %v443 = vunpack.c.l.b16 %v404
    %v444 = vunpack.c.l.b16 %v405
    %v445 = vunpack.c.l.b16 %v406
    %v446 = vunpack.c.l.b16 %v407
    %v447 = vunpack.c.l.b16 %v408
    %v448 = vunpack.c.l.b16 %v409
    %v449 = vpack.c.b16 %v434, %v433
    %v450 = vpack.c.b16 %v436, %v435
    %v451 = vpack.c.b16 %v438, %v437
    %v452 = vpack.c.b16 %v440, %v439
    %v453 = vpack.c.b16 %v442, %v441
    %v454 = vpack.c.b16 %v444, %v443
    %v455 = vpack.c.b16 %v446, %v445
    %v456 = vpack.c.b16 %v448, %v447
    %465 = vmatprep.subr.bf16.mxu0 0
    %466 = vmatpush1.bf16.msra.mxu0 %v449
    %467 = vmatprep.subr.bf16.mxu0 0
    %468 = vmatpush1.bf16.msra.mxu0 %v450
    %469 = vmatprep.subr.bf16.mxu0 0
    %470 = vmatpush1.bf16.msra.mxu0 %v451
    %471 = vmatprep.subr.bf16.mxu0 0
    %472 = vmatpush1.bf16.msra.mxu0 %v452
    %473 = vmatprep.subr.bf16.mxu0 0
    %474 = vmatpush1.bf16.msra.mxu0 %v453
    %475 = vmatprep.subr.bf16.mxu0 0
    %476 = vmatpush1.bf16.msra.mxu0 %v454
    %477 = vmatprep.subr.bf16.mxu0 0
    %478 = vmatpush1.bf16.msra.mxu0 %v455
    %479 = vmatprep.subr.bf16.mxu0 0
    %480 = vmatpush1.bf16.msra.mxu0 %v456
    %481 = vmatprep.subr.bf16.mxu0 0
    %482 = vmatpush1.bf16.msra.mxu0 0
    %483 = vmatprep.subr.bf16.mxu0 0
    %484 = vmatpush1.bf16.msra.mxu0 0
    %485 = vmatprep.subr.bf16.mxu0 0
    %486 = vmatpush1.bf16.msra.mxu0 0
    %487 = vmatprep.subr.bf16.mxu0 0
    %488 = vmatpush1.bf16.msra.mxu0 0
    %489 = vmatprep.subr.bf16.mxu0 0
    %490 = vmatpush1.bf16.msra.mxu0 0
    %491 = vmatprep.subr.bf16.mxu0 0
    %492 = vmatpush1.bf16.msra.mxu0 0
    %493 = vmatprep.subr.bf16.mxu0 0
    %494 = vmatpush1.bf16.msra.mxu0 0
    %495 = vmatprep.subr.bf16.mxu0 0
    %496 = vmatpush1.bf16.msra.mxu0 0
    %497 = vmatprep.mubr.bf16.mxu0 0
    %498 = vmatmul.mubr.bf16.gmra.mrb[0].mxu0 %v393
    %v499 = vpop.f32.mrb[0].mxu0
    %v500 = vadd.f32 %v415, %v499
    %v501 = vpop.f32.mrb[0].mxu0
    %v502 = vpop.f32.mrb[0].mxu0
    %v503 = vpop.f32.mrb[0].mxu0
    %504 = vdwg.mxu0
    %vm505 = vcmp.ge.f32.partialorder %v500, 0.0
    %v506 = vmul.f32 %v500, 0.2
    %v507 = vsel %vm505, %v500, %v506
    %v508 = vpack.c.bf16 %v507, %v507
    %v509 = vld [vmem:[#allocation8] sm:$0xf]
    %v510 = vld [vmem:[#allocation8 + $0x4] sm:$0xf]
    %v511 = vld [vmem:[#allocation8 + $0x8] sm:$0xf]
    %v512 = vld [vmem:[#allocation8 + $0xc] sm:$0xf]
    %v513 = vld [vmem:[#allocation8 + $0x10] sm:$0xf]
    %v514 = vld [vmem:[#allocation8 + $0x14] sm:$0xf]
    %v515 = vld [vmem:[#allocation8 + $0x18] sm:$0xf]
    %v516 = vld [vmem:[#allocation8 + $0x1c] sm:$0xf]
    %v517 = vld [vmem:[#allocation8 + $0x20] sm:$0xf]
    %v518 = vld [vmem:[#allocation8 + $0x24] sm:$0xf]
    %v519 = vld [vmem:[#allocation8 + $0x28] sm:$0xf]
    %v520 = vld [vmem:[#allocation8 + $0x2c] sm:$0xf]
    %v521 = vld [vmem:[#allocation8 + $0x30] sm:$0xf]
    %v522 = vld [vmem:[#allocation8 + $0x34] sm:$0xf]
    %v523 = vld [vmem:[#allocation8 + $0x38] sm:$0xf]
    %v524 = vld [vmem:[#allocation8 + $0x3c] sm:$0xf]
    %v525 = vld [vmem:[#allocation20] sm:$0x1]
    %v527 = vlaneseq
    %v528 = vshrl.u32 %v527, 7
    %v529 = vsub.s32 0, %v528
    %v530 = vrot.slane %v525, %v529
    %v548 = vunpack.c.l.b16 %v509
    %v549 = vunpack.c.l.b16 %v510
    %v550 = vunpack.c.l.b16 %v511
    %v551 = vunpack.c.l.b16 %v512
    %v552 = vunpack.c.l.b16 %v513
    %v553 = vunpack.c.l.b16 %v514
    %v554 = vunpack.c.l.b16 %v515
    %v555 = vunpack.c.l.b16 %v516
    %v556 = vunpack.c.l.b16 %v517
    %v557 = vunpack.c.l.b16 %v518
    %v558 = vunpack.c.l.b16 %v519
    %v559 = vunpack.c.l.b16 %v520
    %v560 = vunpack.c.l.b16 %v521
    %v561 = vunpack.c.l.b16 %v522
    %v562 = vunpack.c.l.b16 %v523
    %v563 = vunpack.c.l.b16 %v524
    %v564 = vpack.c.b16 %v549, %v548
    %v565 = vpack.c.b16 %v551, %v550
    %v566 = vpack.c.b16 %v553, %v552
    %v567 = vpack.c.b16 %v555, %v554
    %v568 = vpack.c.b16 %v557, %v556
    %v569 = vpack.c.b16 %v559, %v558
    %v570 = vpack.c.b16 %v561, %v560
    %v571 = vpack.c.b16 %v563, %v562
    %580 = vmatprep.subr.bf16.mxu0 0
    %581 = vmatpush1.bf16.msra.mxu0 %v564
    %582 = vmatprep.subr.bf16.mxu0 0
    %583 = vmatpush1.bf16.msra.mxu0 %v565
    %584 = vmatprep.subr.bf16.mxu0 0
    %585 = vmatpush1.bf16.msra.mxu0 %v566
    %586 = vmatprep.subr.bf16.mxu0 0
    %587 = vmatpush1.bf16.msra.mxu0 %v567
    %588 = vmatprep.subr.bf16.mxu0 0
    %589 = vmatpush1.bf16.msra.mxu0 %v568
    %590 = vmatprep.subr.bf16.mxu0 0
    %591 = vmatpush1.bf16.msra.mxu0 %v569
    %592 = vmatprep.subr.bf16.mxu0 0
    %593 = vmatpush1.bf16.msra.mxu0 %v570
    %594 = vmatprep.subr.bf16.mxu0 0
    %595 = vmatpush1.bf16.msra.mxu0 %v571
    %596 = vmatprep.subr.bf16.mxu0 0
    %597 = vmatpush1.bf16.msra.mxu0 0
    %598 = vmatprep.subr.bf16.mxu0 0
    %599 = vmatpush1.bf16.msra.mxu0 0
    %600 = vmatprep.subr.bf16.mxu0 0
    %601 = vmatpush1.bf16.msra.mxu0 0
    %602 = vmatprep.subr.bf16.mxu0 0
    %603 = vmatpush1.bf16.msra.mxu0 0
    %604 = vmatprep.subr.bf16.mxu0 0
    %605 = vmatpush1.bf16.msra.mxu0 0
    %606 = vmatprep.subr.bf16.mxu0 0
    %607 = vmatpush1.bf16.msra.mxu0 0
    %608 = vmatprep.subr.bf16.mxu0 0
    %609 = vmatpush1.bf16.msra.mxu0 0
    %610 = vmatprep.subr.bf16.mxu0 0
    %611 = vmatpush1.bf16.msra.mxu0 0
    %612 = vmatprep.mubr.bf16.mxu0 0
    %613 = vmatmul.mubr.bf16.gmra.mrb[0].mxu0 %v508
    %v614 = vpop.f32.mrb[0].mxu0
    %v615 = vadd.f32 %v530, %v614
    %v616 = vpop.f32.mrb[0].mxu0
    %v617 = vpop.f32.mrb[0].mxu0
    %v618 = vpop.f32.mrb[0].mxu0
    %619 = vdwg.mxu0
    %vm620 = vcmp.ge.f32.partialorder %v615, 0.0
    %v621 = vmul.f32 %v615, 0.2
    %v622 = vsel %vm620, %v615, %v621
    %v623 = vpack.c.bf16 %v622, %v622
    %v624 = vld [vmem:[#allocation10] sm:$0xf]
    %v625 = vld [vmem:[#allocation10 + $0x4] sm:$0xf]
    %v626 = vld [vmem:[#allocation10 + $0x8] sm:$0xf]
    %v627 = vld [vmem:[#allocation10 + $0xc] sm:$0xf]
    %v628 = vld [vmem:[#allocation10 + $0x10] sm:$0xf]
    %v629 = vld [vmem:[#allocation10 + $0x14] sm:$0xf]
    %v630 = vld [vmem:[#allocation10 + $0x18] sm:$0xf]
    %v631 = vld [vmem:[#allocation10 + $0x1c] sm:$0xf]
    %v632 = vld [vmem:[#allocation10 + $0x20] sm:$0xf]
    %v633 = vld [vmem:[#allocation10 + $0x24] sm:$0xf]
    %v634 = vld [vmem:[#allocation10 + $0x28] sm:$0xf]
    %v635 = vld [vmem:[#allocation10 + $0x2c] sm:$0xf]
    %v636 = vld [vmem:[#allocation10 + $0x30] sm:$0xf]
    %v637 = vld [vmem:[#allocation10 + $0x34] sm:$0xf]
    %v638 = vld [vmem:[#allocation10 + $0x38] sm:$0xf]
    %v639 = vld [vmem:[#allocation10 + $0x3c] sm:$0xf]
    %v640 = vld [vmem:[#allocation22] sm:$0x1]
    %v642 = vlaneseq
    %v643 = vshrl.u32 %v642, 7
    %v644 = vsub.s32 0, %v643
    %v645 = vrot.slane %v640, %v644
    %v663 = vunpack.c.l.b16 %v624
    %v664 = vunpack.c.l.b16 %v625
    %v665 = vunpack.c.l.b16 %v626
    %v666 = vunpack.c.l.b16 %v627
    %v667 = vunpack.c.l.b16 %v628
    %v668 = vunpack.c.l.b16 %v629
    %v669 = vunpack.c.l.b16 %v630
    %v670 = vunpack.c.l.b16 %v631
    %v671 = vunpack.c.l.b16 %v632
    %v672 = vunpack.c.l.b16 %v633
    %v673 = vunpack.c.l.b16 %v634
    %v674 = vunpack.c.l.b16 %v635
    %v675 = vunpack.c.l.b16 %v636
    %v676 = vunpack.c.l.b16 %v637
    %v677 = vunpack.c.l.b16 %v638
    %v678 = vunpack.c.l.b16 %v639
    %v679 = vpack.c.b16 %v664, %v663
    %v680 = vpack.c.b16 %v666, %v665
    %v681 = vpack.c.b16 %v668, %v667
    %v682 = vpack.c.b16 %v670, %v669
    %v683 = vpack.c.b16 %v672, %v671
    %v684 = vpack.c.b16 %v674, %v673
    %v685 = vpack.c.b16 %v676, %v675
    %v686 = vpack.c.b16 %v678, %v677
    %695 = vmatprep.subr.bf16.mxu0 0
    %696 = vmatpush1.bf16.msra.mxu0 %v679
    %697 = vmatprep.subr.bf16.mxu0 0
    %698 = vmatpush1.bf16.msra.mxu0 %v680
    %699 = vmatprep.subr.bf16.mxu0 0
    %700 = vmatpush1.bf16.msra.mxu0 %v681
    %701 = vmatprep.subr.bf16.mxu0 0
    %702 = vmatpush1.bf16.msra.mxu0 %v682
    %703 = vmatprep.subr.bf16.mxu0 0
    %704 = vmatpush1.bf16.msra.mxu0 %v683
    %705 = vmatprep.subr.bf16.mxu0 0
    %706 = vmatpush1.bf16.msra.mxu0 %v684
    %707 = vmatprep.subr.bf16.mxu0 0
    %708 = vmatpush1.bf16.msra.mxu0 %v685
    %709 = vmatprep.subr.bf16.mxu0 0
    %710 = vmatpush1.bf16.msra.mxu0 %v686
    %711 = vmatprep.subr.bf16.mxu0 0
    %712 = vmatpush1.bf16.msra.mxu0 0
    %713 = vmatprep.subr.bf16.mxu0 0
    %714 = vmatpush1.bf16.msra.mxu0 0
    %715 = vmatprep.subr.bf16.mxu0 0
    %716 = vmatpush1.bf16.msra.mxu0 0
    %717 = vmatprep.subr.bf16.mxu0 0
    %718 = vmatpush1.bf16.msra.mxu0 0
    %719 = vmatprep.subr.bf16.mxu0 0
    %720 = vmatpush1.bf16.msra.mxu0 0
    %721 = vmatprep.subr.bf16.mxu0 0
    %722 = vmatpush1.bf16.msra.mxu0 0
    %723 = vmatprep.subr.bf16.mxu0 0
    %724 = vmatpush1.bf16.msra.mxu0 0
    %725 = vmatprep.subr.bf16.mxu0 0
    %726 = vmatpush1.bf16.msra.mxu0 0
    %727 = vmatprep.mubr.bf16.mxu0 0
    %728 = vmatmul.mubr.bf16.gmra.mrb[0].mxu0 %v623
    %v729 = vpop.f32.mrb[0].mxu0
    %v730 = vadd.f32 %v645, %v729
    %v731 = vpop.f32.mrb[0].mxu0
    %v732 = vpop.f32.mrb[0].mxu0
    %v733 = vpop.f32.mrb[0].mxu0
    %734 = vdwg.mxu0
    %vm735 = vcmp.ge.f32.partialorder %v730, 0.0
    %v736 = vmul.f32 %v730, 0.2
    %v737 = vsel %vm735, %v730, %v736
    %v738 = vpack.c.bf16 %v737, %v737
    %v739 = vld [vmem:[#allocation11] sm:$0xf]
    %v740 = vld [vmem:[#allocation11 + $0x4] sm:$0xf]
    %v741 = vld [vmem:[#allocation11 + $0x8] sm:$0xf]
    %v742 = vld [vmem:[#allocation11 + $0xc] sm:$0xf]
    %v743 = vld [vmem:[#allocation11 + $0x10] sm:$0xf]
    %v744 = vld [vmem:[#allocation11 + $0x14] sm:$0xf]
    %v745 = vld [vmem:[#allocation11 + $0x18] sm:$0xf]
    %v746 = vld [vmem:[#allocation11 + $0x1c] sm:$0xf]
    %v747 = vld [vmem:[#allocation11 + $0x20] sm:$0xf]
    %v748 = vld [vmem:[#allocation11 + $0x24] sm:$0xf]
    %v749 = vld [vmem:[#allocation11 + $0x28] sm:$0xf]
    %v750 = vld [vmem:[#allocation11 + $0x2c] sm:$0xf]
    %v751 = vld [vmem:[#allocation11 + $0x30] sm:$0xf]
    %v752 = vld [vmem:[#allocation11 + $0x34] sm:$0xf]
    %v753 = vld [vmem:[#allocation11 + $0x38] sm:$0xf]
    %v754 = vld [vmem:[#allocation11 + $0x3c] sm:$0xf]
    %v755 = vld [vmem:[#allocation23] sm:$0x1]
    %v757 = vlaneseq
    %v758 = vshrl.u32 %v757, 7
    %v759 = vsub.s32 0, %v758
    %v760 = vrot.slane %v755, %v759
    %v778 = vunpack.c.l.b16 %v739
    %v779 = vunpack.c.l.b16 %v740
    %v780 = vunpack.c.l.b16 %v741
    %v781 = vunpack.c.l.b16 %v742
    %v782 = vunpack.c.l.b16 %v743
    %v783 = vunpack.c.l.b16 %v744
    %v784 = vunpack.c.l.b16 %v745
    %v785 = vunpack.c.l.b16 %v746
    %v786 = vunpack.c.l.b16 %v747
    %v787 = vunpack.c.l.b16 %v748
    %v788 = vunpack.c.l.b16 %v749
    %v789 = vunpack.c.l.b16 %v750
    %v790 = vunpack.c.l.b16 %v751
    %v791 = vunpack.c.l.b16 %v752
    %v792 = vunpack.c.l.b16 %v753
    %v793 = vunpack.c.l.b16 %v754
    %v794 = vpack.c.b16 %v779, %v778
    %v795 = vpack.c.b16 %v781, %v780
    %v796 = vpack.c.b16 %v783, %v782
    %v797 = vpack.c.b16 %v785, %v784
    %v798 = vpack.c.b16 %v787, %v786
    %v799 = vpack.c.b16 %v789, %v788
    %v800 = vpack.c.b16 %v791, %v790
    %v801 = vpack.c.b16 %v793, %v792
    %810 = vmatprep.subr.bf16.mxu0 0
    %811 = vmatpush1.bf16.msra.mxu0 %v794
    %812 = vmatprep.subr.bf16.mxu0 0
    %813 = vmatpush1.bf16.msra.mxu0 %v795
    %814 = vmatprep.subr.bf16.mxu0 0
    %815 = vmatpush1.bf16.msra.mxu0 %v796
    %816 = vmatprep.subr.bf16.mxu0 0
    %817 = vmatpush1.bf16.msra.mxu0 %v797
    %818 = vmatprep.subr.bf16.mxu0 0
    %819 = vmatpush1.bf16.msra.mxu0 %v798
    %820 = vmatprep.subr.bf16.mxu0 0
    %821 = vmatpush1.bf16.msra.mxu0 %v799
    %822 = vmatprep.subr.bf16.mxu0 0
    %823 = vmatpush1.bf16.msra.mxu0 %v800
    %824 = vmatprep.subr.bf16.mxu0 0
    %825 = vmatpush1.bf16.msra.mxu0 %v801
    %826 = vmatprep.subr.bf16.mxu0 0
    %827 = vmatpush1.bf16.msra.mxu0 0
    %828 = vmatprep.subr.bf16.mxu0 0
    %829 = vmatpush1.bf16.msra.mxu0 0
    %830 = vmatprep.subr.bf16.mxu0 0
    %831 = vmatpush1.bf16.msra.mxu0 0
    %832 = vmatprep.subr.bf16.mxu0 0
    %833 = vmatpush1.bf16.msra.mxu0 0
    %834 = vmatprep.subr.bf16.mxu0 0
    %835 = vmatpush1.bf16.msra.mxu0 0
    %836 = vmatprep.subr.bf16.mxu0 0
    %837 = vmatpush1.bf16.msra.mxu0 0
    %838 = vmatprep.subr.bf16.mxu0 0
    %839 = vmatpush1.bf16.msra.mxu0 0
    %840 = vmatprep.subr.bf16.mxu0 0
    %841 = vmatpush1.bf16.msra.mxu0 0
    %842 = vmatprep.mubr.bf16.mxu0 0
    %843 = vmatmul.mubr.bf16.gmra.mrb[0].mxu0 %v738
    %v844 = vpop.f32.mrb[0].mxu0
    %v845 = vadd.f32 %v760, %v844
    %v846 = vpop.f32.mrb[0].mxu0
    %v847 = vpop.f32.mrb[0].mxu0
    %v848 = vpop.f32.mrb[0].mxu0
    %849 = vdwg.mxu0
    %vm850 = vcmp.ge.f32.partialorder %v845, 0.0
    %v851 = vmul.f32 %v845, 0.2
    %v852 = vsel %vm850, %v845, %v851
    %v853 = vpack.c.bf16 %v852, %v852
    %v854 = vld [vmem:[#allocation13] sm:$0xf]
    %v855 = vld [vmem:[#allocation13 + $0x4] sm:$0xf]
    %v856 = vld [vmem:[#allocation13 + $0x8] sm:$0xf]
    %v857 = vld [vmem:[#allocation13 + $0xc] sm:$0xf]
    %v858 = vld [vmem:[#allocation13 + $0x10] sm:$0xf]
    %v859 = vld [vmem:[#allocation13 + $0x14] sm:$0xf]
    %v860 = vld [vmem:[#allocation13 + $0x18] sm:$0xf]
    %v861 = vld [vmem:[#allocation13 + $0x1c] sm:$0xf]
    %v862 = vld [vmem:[#allocation13 + $0x20] sm:$0xf]
    %v863 = vld [vmem:[#allocation13 + $0x24] sm:$0xf]
    %v864 = vld [vmem:[#allocation13 + $0x28] sm:$0xf]
    %v865 = vld [vmem:[#allocation13 + $0x2c] sm:$0xf]
    %v866 = vld [vmem:[#allocation13 + $0x30] sm:$0xf]
    %v867 = vld [vmem:[#allocation13 + $0x34] sm:$0xf]
    %v868 = vld [vmem:[#allocation13 + $0x38] sm:$0xf]
    %v869 = vld [vmem:[#allocation13 + $0x3c] sm:$0xf]
    %v870 = vld [vmem:[#allocation25] sm:$0x1]
    %v872 = vlaneseq
    %v873 = vshrl.u32 %v872, 7
    %v874 = vsub.s32 0, %v873
    %v875 = vrot.slane %v870, %v874
    %v893 = vunpack.c.l.b16 %v854
    %v894 = vunpack.c.l.b16 %v855
    %v895 = vunpack.c.l.b16 %v856
    %v896 = vunpack.c.l.b16 %v857
    %v897 = vunpack.c.l.b16 %v858
    %v898 = vunpack.c.l.b16 %v859
    %v899 = vunpack.c.l.b16 %v860
    %v900 = vunpack.c.l.b16 %v861
    %v901 = vunpack.c.l.b16 %v862
    %v902 = vunpack.c.l.b16 %v863
    %v903 = vunpack.c.l.b16 %v864
    %v904 = vunpack.c.l.b16 %v865
    %v905 = vunpack.c.l.b16 %v866
    %v906 = vunpack.c.l.b16 %v867
    %v907 = vunpack.c.l.b16 %v868
    %v908 = vunpack.c.l.b16 %v869
    %v909 = vpack.c.b16 %v894, %v893
    %v910 = vpack.c.b16 %v896, %v895
    %v911 = vpack.c.b16 %v898, %v897
    %v912 = vpack.c.b16 %v900, %v899
    %v913 = vpack.c.b16 %v902, %v901
    %v914 = vpack.c.b16 %v904, %v903
    %v915 = vpack.c.b16 %v906, %v905
    %v916 = vpack.c.b16 %v908, %v907
    %925 = vmatprep.subr.bf16.mxu0 0
    %926 = vmatpush1.bf16.msra.mxu0 %v909
    %927 = vmatprep.subr.bf16.mxu0 0
    %928 = vmatpush1.bf16.msra.mxu0 %v910
    %929 = vmatprep.subr.bf16.mxu0 0
    %930 = vmatpush1.bf16.msra.mxu0 %v911
    %931 = vmatprep.subr.bf16.mxu0 0
    %932 = vmatpush1.bf16.msra.mxu0 %v912
    %933 = vmatprep.subr.bf16.mxu0 0
    %934 = vmatpush1.bf16.msra.mxu0 %v913
    %935 = vmatprep.subr.bf16.mxu0 0
    %936 = vmatpush1.bf16.msra.mxu0 %v914
    %937 = vmatprep.subr.bf16.mxu0 0
    %938 = vmatpush1.bf16.msra.mxu0 %v915
    %939 = vmatprep.subr.bf16.mxu0 0
    %940 = vmatpush1.bf16.msra.mxu0 %v916
    %941 = vmatprep.subr.bf16.mxu0 0
    %942 = vmatpush1.bf16.msra.mxu0 0
    %943 = vmatprep.subr.bf16.mxu0 0
    %944 = vmatpush1.bf16.msra.mxu0 0
    %945 = vmatprep.subr.bf16.mxu0 0
    %946 = vmatpush1.bf16.msra.mxu0 0
    %947 = vmatprep.subr.bf16.mxu0 0
    %948 = vmatpush1.bf16.msra.mxu0 0
    %949 = vmatprep.subr.bf16.mxu0 0
    %950 = vmatpush1.bf16.msra.mxu0 0
    %951 = vmatprep.subr.bf16.mxu0 0
    %952 = vmatpush1.bf16.msra.mxu0 0
    %953 = vmatprep.subr.bf16.mxu0 0
    %954 = vmatpush1.bf16.msra.mxu0 0
    %955 = vmatprep.subr.bf16.mxu0 0
    %956 = vmatpush1.bf16.msra.mxu0 0
    %957 = vmatprep.mubr.bf16.mxu0 0
    %958 = vmatmul.mubr.bf16.gmra.mrb[0].mxu0 %v853
    %v959 = vpop.f32.mrb[0].mxu0
    %v960 = vadd.f32 %v875, %v959
    %v961 = vpop.f32.mrb[0].mxu0
    %v962 = vpop.f32.mrb[0].mxu0
    %v963 = vpop.f32.mrb[0].mxu0
    %964 = vdwg.mxu0
    %vm965 = vcmp.ge.f32.partialorder %v960, 0.0
    %v966 = vmul.f32 %v960, 0.2
    %v967 = vsel %vm965, %v960, %v966
    %v968 = vpack.c.bf16 %v967, %v967
    %v969 = vld [vmem:[#allocation14] sm:$0xf]
    %v970 = vld [vmem:[#allocation14 + $0x4] sm:$0xf]
    %v971 = vld [vmem:[#allocation14 + $0x8] sm:$0xf]
    %v972 = vld [vmem:[#allocation14 + $0xc] sm:$0xf]
    %v973 = vld [vmem:[#allocation14 + $0x10] sm:$0xf]
    %v974 = vld [vmem:[#allocation14 + $0x14] sm:$0xf]
    %v975 = vld [vmem:[#allocation14 + $0x18] sm:$0xf]
    %v976 = vld [vmem:[#allocation14 + $0x1c] sm:$0xf]
    %v977 = vld [vmem:[#allocation14 + $0x20] sm:$0xf]
    %v978 = vld [vmem:[#allocation14 + $0x24] sm:$0xf]
    %v979 = vld [vmem:[#allocation14 + $0x28] sm:$0xf]
    %v980 = vld [vmem:[#allocation14 + $0x2c] sm:$0xf]
    %v981 = vld [vmem:[#allocation14 + $0x30] sm:$0xf]
    %v982 = vld [vmem:[#allocation14 + $0x34] sm:$0xf]
    %v983 = vld [vmem:[#allocation14 + $0x38] sm:$0xf]
    %v984 = vld [vmem:[#allocation14 + $0x3c] sm:$0xf]
    %v985 = vld [vmem:[#allocation26] sm:$0x1]
    %v987 = vlaneseq
    %v988 = vshrl.u32 %v987, 7
    %v989 = vsub.s32 0, %v988
    %v990 = vrot.slane %v985, %v989
    %v1008 = vunpack.c.l.b16 %v969
    %v1009 = vunpack.c.l.b16 %v970
    %v1010 = vunpack.c.l.b16 %v971
    %v1011 = vunpack.c.l.b16 %v972
    %v1012 = vunpack.c.l.b16 %v973
    %v1013 = vunpack.c.l.b16 %v974
    %v1014 = vunpack.c.l.b16 %v975
    %v1015 = vunpack.c.l.b16 %v976
    %v1016 = vunpack.c.l.b16 %v977
    %v1017 = vunpack.c.l.b16 %v978
    %v1018 = vunpack.c.l.b16 %v979
    %v1019 = vunpack.c.l.b16 %v980
    %v1020 = vunpack.c.l.b16 %v981
    %v1021 = vunpack.c.l.b16 %v982
    %v1022 = vunpack.c.l.b16 %v983
    %v1023 = vunpack.c.l.b16 %v984
    %v1024 = vpack.c.b16 %v1009, %v1008
    %v1025 = vpack.c.b16 %v1011, %v1010
    %v1026 = vpack.c.b16 %v1013, %v1012
    %v1027 = vpack.c.b16 %v1015, %v1014
    %v1028 = vpack.c.b16 %v1017, %v1016
    %v1029 = vpack.c.b16 %v1019, %v1018
    %v1030 = vpack.c.b16 %v1021, %v1020
    %v1031 = vpack.c.b16 %v1023, %v1022
    %1040 = vmatprep.subr.bf16.mxu0 0
    %1041 = vmatpush1.bf16.msra.mxu0 %v1024
    %1042 = vmatprep.subr.bf16.mxu0 0
    %1043 = vmatpush1.bf16.msra.mxu0 %v1025
    %1044 = vmatprep.subr.bf16.mxu0 0
    %1045 = vmatpush1.bf16.msra.mxu0 %v1026
    %1046 = vmatprep.subr.bf16.mxu0 0
    %1047 = vmatpush1.bf16.msra.mxu0 %v1027
    %1048 = vmatprep.subr.bf16.mxu0 0
    %1049 = vmatpush1.bf16.msra.mxu0 %v1028
    %1050 = vmatprep.subr.bf16.mxu0 0
    %1051 = vmatpush1.bf16.msra.mxu0 %v1029
    %1052 = vmatprep.subr.bf16.mxu0 0
    %1053 = vmatpush1.bf16.msra.mxu0 %v1030
    %1054 = vmatprep.subr.bf16.mxu0 0
    %1055 = vmatpush1.bf16.msra.mxu0 %v1031
    %1056 = vmatprep.subr.bf16.mxu0 0
    %1057 = vmatpush1.bf16.msra.mxu0 0
    %1058 = vmatprep.subr.bf16.mxu0 0
    %1059 = vmatpush1.bf16.msra.mxu0 0
    %1060 = vmatprep.subr.bf16.mxu0 0
    %1061 = vmatpush1.bf16.msra.mxu0 0
    %1062 = vmatprep.subr.bf16.mxu0 0
    %1063 = vmatpush1.bf16.msra.mxu0 0
    %1064 = vmatprep.subr.bf16.mxu0 0
    %1065 = vmatpush1.bf16.msra.mxu0 0
    %1066 = vmatprep.subr.bf16.mxu0 0
    %1067 = vmatpush1.bf16.msra.mxu0 0
    %1068 = vmatprep.subr.bf16.mxu0 0
    %1069 = vmatpush1.bf16.msra.mxu0 0
    %1070 = vmatprep.subr.bf16.mxu0 0
    %1071 = vmatpush1.bf16.msra.mxu0 0
    %1072 = vmatprep.mubr.bf16.mxu0 0
    %1073 = vmatmul.mubr.bf16.gmra.mrb[0].mxu0 %v968
    %v1074 = vpop.f32.mrb[0].mxu0
    %v1075 = vadd.f32 %v990, %v1074
    %v1076 = vpop.f32.mrb[0].mxu0
    %v1077 = vpop.f32.mrb[0].mxu0
    %v1078 = vpop.f32.mrb[0].mxu0
    %1079 = vdwg.mxu0
    %vm1080 = vcmp.ge.f32.partialorder %v1075, 0.0
    %v1081 = vmul.f32 %v1075, 0.2
    %v1082 = vsel %vm1080, %v1075, %v1081
    %v1083 = vpack.c.bf16 %v1082, %v1082
    %v1084 = vld [vmem:[#allocation16] sm:$0xf]
    %v1085 = vld [vmem:[#allocation16 + $0x4] sm:$0xf]
    %v1086 = vld [vmem:[#allocation16 + $0x8] sm:$0xf]
    %v1087 = vld [vmem:[#allocation16 + $0xc] sm:$0xf]
    %v1088 = vld [vmem:[#allocation16 + $0x10] sm:$0xf]
    %v1089 = vld [vmem:[#allocation16 + $0x14] sm:$0xf]
    %v1090 = vld [vmem:[#allocation16 + $0x18] sm:$0xf]
    %v1091 = vld [vmem:[#allocation16 + $0x1c] sm:$0xf]
    %v1092 = vld [vmem:[#allocation16 + $0x20] sm:$0xf]
    %v1093 = vld [vmem:[#allocation16 + $0x24] sm:$0xf]
    %v1094 = vld [vmem:[#allocation16 + $0x28] sm:$0xf]
    %v1095 = vld [vmem:[#allocation16 + $0x2c] sm:$0xf]
    %v1096 = vld [vmem:[#allocation16 + $0x30] sm:$0xf]
    %v1097 = vld [vmem:[#allocation16 + $0x34] sm:$0xf]
    %v1098 = vld [vmem:[#allocation16 + $0x38] sm:$0xf]
    %v1099 = vld [vmem:[#allocation16 + $0x3c] sm:$0xf]
    %v1100 = vld [vmem:[#allocation28] sm:$0x1]
    %v1102 = vlaneseq
    %v1103 = vshrl.u32 %v1102, 7
    %v1104 = vsub.s32 0, %v1103
    %v1105 = vrot.slane %v1100, %v1104
    %v1123 = vunpack.c.l.b16 %v1084
    %v1124 = vunpack.c.l.b16 %v1085
    %v1125 = vunpack.c.l.b16 %v1086
    %v1126 = vunpack.c.l.b16 %v1087
    %v1127 = vunpack.c.l.b16 %v1088
    %v1128 = vunpack.c.l.b16 %v1089
    %v1129 = vunpack.c.l.b16 %v1090
    %v1130 = vunpack.c.l.b16 %v1091
    %v1131 = vunpack.c.l.b16 %v1092
    %v1132 = vunpack.c.l.b16 %v1093
    %v1133 = vunpack.c.l.b16 %v1094
    %v1134 = vunpack.c.l.b16 %v1095
    %v1135 = vunpack.c.l.b16 %v1096
    %v1136 = vunpack.c.l.b16 %v1097
    %v1137 = vunpack.c.l.b16 %v1098
    %v1138 = vunpack.c.l.b16 %v1099
    %v1139 = vpack.c.b16 %v1124, %v1123
    %v1140 = vpack.c.b16 %v1126, %v1125
    %v1141 = vpack.c.b16 %v1128, %v1127
    %v1142 = vpack.c.b16 %v1130, %v1129
    %v1143 = vpack.c.b16 %v1132, %v1131
    %v1144 = vpack.c.b16 %v1134, %v1133
    %v1145 = vpack.c.b16 %v1136, %v1135
    %v1146 = vpack.c.b16 %v1138, %v1137
    %1155 = vmatprep.subr.bf16.mxu0 0
    %1156 = vmatpush1.bf16.msra.mxu0 %v1139
    %1157 = vmatprep.subr.bf16.mxu0 0
    %1158 = vmatpush1.bf16.msra.mxu0 %v1140
    %1159 = vmatprep.subr.bf16.mxu0 0
    %1160 = vmatpush1.bf16.msra.mxu0 %v1141
    %1161 = vmatprep.subr.bf16.mxu0 0
    %1162 = vmatpush1.bf16.msra.mxu0 %v1142
    %1163 = vmatprep.subr.bf16.mxu0 0
    %1164 = vmatpush1.bf16.msra.mxu0 %v1143
    %1165 = vmatprep.subr.bf16.mxu0 0
    %1166 = vmatpush1.bf16.msra.mxu0 %v1144
    %1167 = vmatprep.subr.bf16.mxu0 0
    %1168 = vmatpush1.bf16.msra.mxu0 %v1145
    %1169 = vmatprep.subr.bf16.mxu0 0
    %1170 = vmatpush1.bf16.msra.mxu0 %v1146
    %1171 = vmatprep.subr.bf16.mxu0 0
    %1172 = vmatpush1.bf16.msra.mxu0 0
    %1173 = vmatprep.subr.bf16.mxu0 0
    %1174 = vmatpush1.bf16.msra.mxu0 0
    %1175 = vmatprep.subr.bf16.mxu0 0
    %1176 = vmatpush1.bf16.msra.mxu0 0
    %1177 = vmatprep.subr.bf16.mxu0 0
    %1178 = vmatpush1.bf16.msra.mxu0 0
    %1179 = vmatprep.subr.bf16.mxu0 0
    %1180 = vmatpush1.bf16.msra.mxu0 0
    %1181 = vmatprep.subr.bf16.mxu0 0
    %1182 = vmatpush1.bf16.msra.mxu0 0
    %1183 = vmatprep.subr.bf16.mxu0 0
    %1184 = vmatpush1.bf16.msra.mxu0 0
    %1185 = vmatprep.subr.bf16.mxu0 0
    %1186 = vmatpush1.bf16.msra.mxu0 0
    %1187 = vmatprep.mubr.bf16.mxu0 0
    %1188 = vmatmul.mubr.bf16.gmra.mrb[0].mxu0 %v1083
    %v1189 = vpop.f32.mrb[0].mxu0
    %v1190 = vadd.f32 %v1105, %v1189
    %v1191 = vpop.f32.mrb[0].mxu0
    %v1192 = vpop.f32.mrb[0].mxu0
    %v1193 = vpop.f32.mrb[0].mxu0
    %1194 = vdwg.mxu0
    %1195 = vst [vmem:[#allocation29] sm:$0xff] %v1190
    // Predicated region
    $region138: #{tpu_custom_call.1} parent=1 // pred_check
      _
    $region139: #{tpu_custom_call.1} parent=1 // pred_check_branch
      %1197 = sbr.rel (0) target = $region141
    $region140: #{tpu_custom_call.1} parent=1 // pred_region
      %s1199 = ssub.s32 128, 128
      %1200 = vsyncadd [#allocation4], %s1199
      %s1202 = sshll.u32 [#allocation29], 4
      %s1203 = int_to_ptr.vmem [resolvable:$true] %s1202
      %1205 = dma.vmem_to_hbm [thread:$0]  %s1203, 128, %s17, [#allocation4]
    $region141: #{tpu_custom_call.1} parent=1 // pred_fallthru
      _
    // Predicated region
    $region142: #{tpu_custom_call.1} parent=1 // pred_check
      _
    $region143: #{tpu_custom_call.1} parent=1 // pred_check_branch
      %1207 = sbr.rel (0) target = $region145
    $region144: #{tpu_custom_call.1} parent=1 // pred_region
      %1208 = dma.done [#allocation4], 128
    $region145: #{tpu_custom_call.1} parent=1 // pred_fallthru
      _
    %1209 = vsyncpa [#allocation3], 1
    %1210 = vsyncpa [#allocation6], 1
    %1211 = vsyncpa [#allocation9], 1
    %1212 = vsyncpa [#allocation12], 1
    %1213 = vsyncpa [#allocation15], 1
    %1214 = vsyncpa [#allocation18], 1
    %1215 = vsyncpa [#allocation21], 1
    %1216 = vsyncpa [#allocation24], 1
    %1217 = vsyncpa [#allocation27], 1
    %1218 = vsyncpa [#allocation4], 1

// kernel: tpu_custom_call.1
$region0: #{tpu_custom_call.1}
  #allocation0 [shape = 'u32[]', space=smem, size = 0x4, offset = 0x4, fixed_abs, tag = 'smem constant byte address 0x4 - core index']
  #allocation1 [shape = 'u32[144,128]{1,0:T(1,128)}', space=vmem, size = 0x12000, scoped, tag = 'internal scratch']
  %s0 = inlined_call_operand.hbm [shape: f32[8,128], index: 0, kind: input, shape index: {}]
  %s1 = inlined_call_operand.hbm [shape: bf16[128,128], index: 1, kind: input, shape index: {}]
  %s2 = inlined_call_operand.hbm [shape: bf16[128,128], index: 2, kind: input, shape index: {}]
  %s3 = inlined_call_operand.hbm [shape: bf16[128,128], index: 3, kind: input, shape index: {}]
  %s4 = inlined_call_operand.hbm [shape: bf16[128,128], index: 4, kind: input, shape index: {}]
  %s5 = inlined_call_operand.hbm [shape: bf16[128,128], index: 5, kind: input, shape index: {}]
  %s6 = inlined_call_operand.hbm [shape: bf16[128,128], index: 6, kind: input, shape index: {}]
  %s7 = inlined_call_operand.hbm [shape: bf16[128,128], index: 7, kind: input, shape index: {}]
  %s8 = inlined_call_operand.hbm [shape: bf16[128,128], index: 8, kind: input, shape index: {}]
  %s9 = inlined_call_operand.hbm [shape: f32[1,128], index: 9, kind: input, shape index: {}]
  %s10 = inlined_call_operand.hbm [shape: f32[1,128], index: 10, kind: input, shape index: {}]
  %s11 = inlined_call_operand.hbm [shape: f32[1,128], index: 11, kind: input, shape index: {}]
  %s12 = inlined_call_operand.hbm [shape: f32[1,128], index: 12, kind: input, shape index: {}]
  %s13 = inlined_call_operand.hbm [shape: f32[1,128], index: 13, kind: input, shape index: {}]
  %s14 = inlined_call_operand.hbm [shape: f32[1,128], index: 14, kind: input, shape index: {}]
  %s15 = inlined_call_operand.hbm [shape: f32[1,128], index: 15, kind: input, shape index: {}]
  %s16 = inlined_call_operand.hbm [shape: f32[1,128], index: 16, kind: input, shape index: {}]
  %s17 = inlined_call_operand.hbm [shape: f32[8,128], index: 17, kind: output, shape index: {}]
  %s18 = sld [smem:[#allocation0]]
  $region146: #{tpu_custom_call.1} parent=0
    _
  %s20 = ssub.s32 1, %s18
  %s21 = scalar_select 0, %s20, %s18
  $region1: #{tpu_custom_call.1} parent=0
    #allocation2 [shape = 'u8[4096]{0}', space=vmem, size = 0x1000, scoped, tag = 'input window, operand 0, single buffered']
    #allocation3 [shape = 's32[1]{0}', space=sflag, size = 0x4, scoped, tag = 'scoped memory for tpu_custom_call.1']
    #allocation4 [shape = 's32[1]{0}', space=sflag, size = 0x4, scoped, tag = 'scoped memory for tpu_custom_call.1']
    #allocation5 [shape = 'u8[32768]{0}', space=vmem, size = 0x8000, scoped, tag = 'input window, operand 1, single buffered']
    #allocation6 [shape = 's32[1]{0}', space=sflag, size = 0x4, scoped, tag = 'scoped memory for tpu_custom_call.1']
    #allocation7 [shape = 'u8[32768]{0}', space=vmem, size = 0x8000, scoped, tag = 'input window, operand 2, single buffered']
    #allocation8 [shape = 'u8[32768]{0}', space=vmem, size = 0x8000, scoped, tag = 'input window, operand 3, single buffered']
    #allocation9 [shape = 's32[1]{0}', space=sflag, size = 0x4, scoped, tag = 'scoped memory for tpu_custom_call.1']
    #allocation10 [shape = 'u8[32768]{0}', space=vmem, size = 0x8000, scoped, tag = 'input window, operand 4, single buffered']
    #allocation11 [shape = 'u8[32768]{0}', space=vmem, size = 0x8000, scoped, tag = 'input window, operand 5, single buffered']
    #allocation12 [shape = 's32[1]{0}', space=sflag, size = 0x4, scoped, tag = 'scoped memory for tpu_custom_call.1']
    #allocation13 [shape = 'u8[32768]{0}', space=vmem, size = 0x8000, scoped, tag = 'input window, operand 6, single buffered']
    #allocation14 [shape = 'u8[32768]{0}', space=vmem, size = 0x8000, scoped, tag = 'input window, operand 7, single buffered']
    #allocation15 [shape = 's32[1]{0}', space=sflag, size = 0x4, scoped, tag = 'scoped memory for tpu_custom_call.1']
    #allocation16 [shape = 'u8[32768]{0}', space=vmem, size = 0x8000, scoped, tag = 'input window, operand 8, single buffered']
    #allocation17 [shape = 'u8[512]{0}', space=vmem, size = 0x400, scoped, tag = 'input window, operand 9, single buffered']
    #allocation18 [shape = 's32[1]{0}', space=sflag, size = 0x4, scoped, tag = 'scoped memory for tpu_custom_call.1']
    #allocation19 [shape = 'u8[512]{0}', space=vmem, size = 0x400, scoped, tag = 'input window, operand 10, single buffered']
    #allocation20 [shape = 'u8[512]{0}', space=vmem, size = 0x400, scoped, tag = 'input window, operand 11, single buffered']
    #allocation21 [shape = 's32[1]{0}', space=sflag, size = 0x4, scoped, tag = 'scoped memory for tpu_custom_call.1']
    #allocation22 [shape = 'u8[512]{0}', space=vmem, size = 0x400, scoped, tag = 'input window, operand 12, single buffered']
    #allocation23 [shape = 'u8[512]{0}', space=vmem, size = 0x400, scoped, tag = 'input window, operand 13, single buffered']
    #allocation24 [shape = 's32[1]{0}', space=sflag, size = 0x4, scoped, tag = 'scoped memory for tpu_custom_call.1']
    #allocation25 [shape = 'u8[512]{0}', space=vmem, size = 0x400, scoped, tag = 'input window, operand 14, single buffered']
    #allocation26 [shape = 'u8[512]{0}', space=vmem, size = 0x400, scoped, tag = 'input window, operand 15, single buffered']
    #allocation27 [shape = 's32[1]{0}', space=sflag, size = 0x4, scoped, tag = 'scoped memory for tpu_custom_call.1']
    #allocation28 [shape = 'u8[512]{0}', space=vmem, size = 0x400, scoped, tag = 'input window, operand 16, single buffered']
    #allocation29 [shape = 'u8[4096]{0}', space=vmem, size = 0x1000, scoped, tag = 'output window, operand 0, single buffered']
    %22 = vsyncpa [#allocation3], 0
    %23 = vsyncpa [#allocation6], 0
    %24 = vsyncpa [#allocation9], 0
    %25 = vsyncpa [#allocation12], 0
    %26 = vsyncpa [#allocation15], 0
    %27 = vsyncpa [#allocation18], 0
    %28 = vsyncpa [#allocation21], 0
    %29 = vsyncpa [#allocation24], 0
    %30 = vsyncpa [#allocation27], 0
    %31 = vsyncpa [#allocation4], 0
    // Predicated region
    $region2: #{tpu_custom_call.1} parent=1 // pred_check
      _
    $region3: #{tpu_custom_call.1} parent=1 // pred_check_branch
      %33 = sbr.rel (0) target = $region5
    $region4: #{tpu_custom_call.1} parent=1 // pred_region
      %s35 = ssub.s32 128, 128
      %36 = vsyncadd [#allocation3], %s35
      %s38 = sshll.u32 [#allocation2], 4
      %s39 = int_to_ptr.vmem [resolvable:$true] %s38
      %41 = dma.hbm_to_vmem [thread:$0]  %s0, 128, %s39, [#allocation3]
    $region5: #{tpu_custom_call.1} parent=1 // pred_fallthru
      _
    // Predicated region
    $region6: #{tpu_custom_call.1} parent=1 // pred_check
      _
    $region7: #{tpu_custom_call.1} parent=1 // pred_check_branch
      %43 = sbr.rel (0) target = $region9
    $region8: #{tpu_custom_call.1} parent=1 // pred_region
      %s45 = ssub.s32 1024, 1024
      %46 = vsyncadd [#allocation6], %s45
      %s47 = sshll.u32 [#allocation5], 4
      %s48 = int_to_ptr.vmem [resolvable:$true] %s47
      %53 = dma.hbm_to_vmem [thread:$0]  %s1, 1024, %s48, [#allocation6], 64, 64, 4
    $region9: #{tpu_custom_call.1} parent=1 // pred_fallthru
      _
    // Predicated region
    $region10: #{tpu_custom_call.1} parent=1 // pred_check
      _
    $region11: #{tpu_custom_call.1} parent=1 // pred_check_branch
      %55 = sbr.rel (0) target = $region13
    $region12: #{tpu_custom_call.1} parent=1 // pred_region
      %s57 = ssub.s32 1024, 1024
      %58 = vsyncadd [#allocation6], %s57
      %s59 = sshll.u32 [#allocation7], 4
      %s60 = int_to_ptr.vmem [resolvable:$true] %s59
      %65 = dma.hbm_to_vmem [thread:$0]  %s2, 1024, %s60, [#allocation6], 64, 64, 4
    $region13: #{tpu_custom_call.1} parent=1 // pred_fallthru
      _
    // Predicated region
    $region14: #{tpu_custom_call.1} parent=1 // pred_check
      _
    $region15: #{tpu_custom_call.1} parent=1 // pred_check_branch
      %67 = sbr.rel (0) target = $region17
    $region16: #{tpu_custom_call.1} parent=1 // pred_region
      %s69 = ssub.s32 1024, 1024
      %70 = vsyncadd [#allocation9], %s69
      %s71 = sshll.u32 [#allocation8], 4
      %s72 = int_to_ptr.vmem [resolvable:$true] %s71
      %77 = dma.hbm_to_vmem [thread:$0]  %s3, 1024, %s72, [#allocation9], 64, 64, 4
    $region17: #{tpu_custom_call.1} parent=1 // pred_fallthru
      _
    // Predicated region
    $region18: #{tpu_custom_call.1} parent=1 // pred_check
      _
    $region19: #{tpu_custom_call.1} parent=1 // pred_check_branch
      %79 = sbr.rel (0) target = $region21
    $region20: #{tpu_custom_call.1} parent=1 // pred_region
      %s81 = ssub.s32 1024, 1024
      %82 = vsyncadd [#allocation9], %s81
      %s83 = sshll.u32 [#allocation10], 4
      %s84 = int_to_ptr.vmem [resolvable:$true] %s83
      %89 = dma.hbm_to_vmem [thread:$0]  %s4, 1024, %s84, [#allocation9], 64, 64, 4
    $region21: #{tpu_custom_call.1} parent=1 // pred_fallthru
      _
    // Predicated region
    $region22: #{tpu_custom_call.1} parent=1 // pred_check
      _
    $region23: #{tpu_custom_call.1} parent=1 // pred_check_branch
      %91 = sbr.rel (0) target = $region25
    $region24: #{tpu_custom_call.1} parent=1 // pred_region
      %s93 = ssub.s32 1024, 1024
      %94 = vsyncadd [#allocation12], %s93
      %s95 = sshll.u32 [#allocation11], 4
      %s96 = int_to_ptr.vmem [resolvable:$true] %s95
      %101 = dma.hbm_to_vmem [thread:$0]  %s5, 1024, %s96, [#allocation12], 64, 64, 4
    $region25: #{tpu_custom_call.1} parent=1 // pred_fallthru
      _
    // Predicated region
    $region26: #{tpu_custom_call.1} parent=1 // pred_check
      _
    $region27: #{tpu_custom_call.1} parent=1 // pred_check_branch
      %103 = sbr.rel (0) target = $region29
    $region28: #{tpu_custom_call.1} parent=1 // pred_region
      %s105 = ssub.s32 1024, 1024
      %106 = vsyncadd [#allocation12], %s105
      %s107 = sshll.u32 [#allocation13], 4
      %s108 = int_to_ptr.vmem [resolvable:$true] %s107
      %113 = dma.hbm_to_vmem [thread:$0]  %s6, 1024, %s108, [#allocation12], 64, 64, 4
    $region29: #{tpu_custom_call.1} parent=1 // pred_fallthru
      _
    // Predicated region
    $region30: #{tpu_custom_call.1} parent=1 // pred_check
      _
    $region31: #{tpu_custom_call.1} parent=1 // pred_check_branch
      %115 = sbr.rel (0) target = $region33
    $region32: #{tpu_custom_call.1} parent=1 // pred_region
      %s117 = ssub.s32 1024, 1024
      %118 = vsyncadd [#allocation15], %s117
      %s119 = sshll.u32 [#allocation14], 4
      %s120 = int_to_ptr.vmem [resolvable:$true] %s119
      %125 = dma.hbm_to_vmem [thread:$0]  %s7, 1024, %s120, [#allocation15], 64, 64, 4
    $region33: #{tpu_custom_call.1} parent=1 // pred_fallthru
      _
    // Predicated region
    $region34: #{tpu_custom_call.1} parent=1 // pred_check
      _
    $region35: #{tpu_custom_call.1} parent=1 // pred_check_branch
      %127 = sbr.rel (0) target = $region37
    $region36: #{tpu_custom_call.1} parent=1 // pred_region
      %s129 = ssub.s32 1024, 1024
      %130 = vsyncadd [#allocation15], %s129
      %s131 = sshll.u32 [#allocation16], 4
      %s132 = int_to_ptr.vmem [resolvable:$true] %s131
      %137 = dma.hbm_to_vmem [thread:$0]  %s8, 1024, %s132, [#allocation15], 64, 64, 4
    $region37: #{tpu_custom_call.1} parent=1 // pred_fallthru
      _
    // Predicated region
    $region38: #{tpu_custom_call.1} parent=1 // pred_check
      _
    $region39: #{tpu_custom_call.1} parent=1 // pred_check_branch
      %139 = sbr.rel (0) target = $region41
    $region40: #{tpu_custom_call.1} parent=1 // pred_region
      %s141 = ssub.s32 16, 16
      %142 = vsyncadd [#allocation18], %s141
      %s144 = sshll.u32 [#allocation17], 4
      %s145 = int_to_ptr.vmem [resolvable:$true] %s144
      %147 = dma.hbm_to_vmem [thread:$0]  %s9, 16, %s145, [#allocation18]
    $region41: #{tpu_custom_call.1} parent=1 // pred_fallthru
      _
    // Predicated region
    $region42: #{tpu_custom_call.1} parent=1 // pred_check
      _
    $region43: #{tpu_custom_call.1} parent=1 // pred_check_branch
      %149 = sbr.rel (0) target = $region45
    $region44: #{tpu_custom_call.1} parent=1 // pred_region
      %s151 = ssub.s32 16, 16
      %152 = vsyncadd [#allocation18], %s151
      %s154 = sshll.u32 [#allocation19], 4
      %s155 = int_to_ptr.vmem [resolvable:$true] %s154
      %157 = dma.hbm_to_vmem [thread:$0]  %s10, 16, %s155, [#allocation18]
    $region45: #{tpu_custom_call.1} parent=1 // pred_fallthru
      _
    // Predicated region
    $region46: #{tpu_custom_call.1} parent=1 // pred_check
      _
    $region47: #{tpu_custom_call.1} parent=1 // pred_check_branch
      %159 = sbr.rel (0) target = $region49
    $region48: #{tpu_custom_call.1} parent=1 // pred_region
      %s161 = ssub.s32 16, 16
      %162 = vsyncadd [#allocation21], %s161
      %s164 = sshll.u32 [#allocation20], 4
      %s165 = int_to_ptr.vmem [resolvable:$true] %s164
      %167 = dma.hbm_to_vmem [thread:$0]  %s11, 16, %s165, [#allocation21]
    $region49: #{tpu_custom_call.1} parent=1 // pred_fallthru
      _
    // Predicated region
    $region50: #{tpu_custom_call.1} parent=1 // pred_check
      _
    $region51: #{tpu_custom_call.1} parent=1 // pred_check_branch
      %169 = sbr.rel (0) target = $region53
    $region52: #{tpu_custom_call.1} parent=1 // pred_region
      %s171 = ssub.s32 16, 16
      %172 = vsyncadd [#allocation21], %s171
      %s174 = sshll.u32 [#allocation22], 4
      %s175 = int_to_ptr.vmem [resolvable:$true] %s174
      %177 = dma.hbm_to_vmem [thread:$0]  %s12, 16, %s175, [#allocation21]
    $region53: #{tpu_custom_call.1} parent=1 // pred_fallthru
      _
    // Predicated region
    $region54: #{tpu_custom_call.1} parent=1 // pred_check
      _
    $region55: #{tpu_custom_call.1} parent=1 // pred_check_branch
      %179 = sbr.rel (0) target = $region57
    $region56: #{tpu_custom_call.1} parent=1 // pred_region
      %s181 = ssub.s32 16, 16
      %182 = vsyncadd [#allocation24], %s181
      %s184 = sshll.u32 [#allocation23], 4
      %s185 = int_to_ptr.vmem [resolvable:$true] %s184
      %187 = dma.hbm_to_vmem [thread:$0]  %s13, 16, %s185, [#allocation24]
    $region57: #{tpu_custom_call.1} parent=1 // pred_fallthru
      _
    // Predicated region
    $region58: #{tpu_custom_call.1} parent=1 // pred_check
      _
    $region59: #{tpu_custom_call.1} parent=1 // pred_check_branch
      %189 = sbr.rel (0) target = $region61
    $region60: #{tpu_custom_call.1} parent=1 // pred_region
      %s191 = ssub.s32 16, 16
      %192 = vsyncadd [#allocation24], %s191
      %s194 = sshll.u32 [#allocation25], 4
      %s195 = int_to_ptr.vmem [resolvable:$true] %s194
      %197 = dma.hbm_to_vmem [thread:$0]  %s14, 16, %s195, [#allocation24]
    $region61: #{tpu_custom_call.1} parent=1 // pred_fallthru
      _
    // Predicated region
    $region62: #{tpu_custom_call.1} parent=1 // pred_check
      _
    $region63: #{tpu_custom_call.1} parent=1 // pred_check_branch
      %199 = sbr.rel (0) target = $region65
    $region64: #{tpu_custom_call.1} parent=1 // pred_region
      %s201 = ssub.s32 16, 16
      %202 = vsyncadd [#allocation27], %s201
      %s204 = sshll.u32 [#allocation26], 4
      %s205 = int_to_ptr.vmem [resolvable:$true] %s204
      %207 = dma.hbm_to_vmem [thread:$0]  %s15, 16, %s205, [#allocation27]
    $region65: #{tpu_custom_call.1} parent=1 // pred_fallthru
      _
    // Predicated region
    $region66: #{tpu_custom_call.1} parent=1 // pred_check
      _
    $region67: #{tpu_custom_call.1} parent=1 // pred_check_branch
      %209 = sbr.rel (0) target = $region69
    $region68: #{tpu_custom_call.1} parent=1 // pred_region
      %s211 = ssub.s32 16, 16
      %212 = vsyncadd [#allocation27], %s211
      %s214 = sshll.u32 [#allocation28], 4
      %s215 = int_to_ptr.vmem [resolvable:$true] %s214
      %217 = dma.hbm_to_vmem [thread:$0]  %s16, 16, %s215, [#allocation27]
    $region69: #{tpu_custom_call.1} parent=1 // pred_fallthru
      _
    // Predicated region
    $region70: #{tpu_custom_call.1} parent=1 // pred_check
      _
    $region71: #{tpu_custom_call.1} parent=1 // pred_check_branch
      %219 = sbr.rel (0) target = $region73
    $region72: #{tpu_custom_call.1} parent=1 // pred_region
      %220 = dma.done [#allocation3], 128
    $region73: #{tpu_custom_call.1} parent=1 // pred_fallthru
      _
    // Predicated region
    $region74: #{tpu_custom_call.1} parent=1 // pred_check
      _
    $region75: #{tpu_custom_call.1} parent=1 // pred_check_branch
      %222 = sbr.rel (0) target = $region77
    $region76: #{tpu_custom_call.1} parent=1 // pred_region
      %223 = dma.done [#allocation6], 1024
    $region77: #{tpu_custom_call.1} parent=1 // pred_fallthru
      _
    // Predicated region
    $region78: #{tpu_custom_call.1} parent=1 // pred_check
      _
    $region79: #{tpu_custom_call.1} parent=1 // pred_check_branch
      %225 = sbr.rel (0) target = $region81
    $region80: #{tpu_custom_call.1} parent=1 // pred_region
      %226 = dma.done [#allocation6], 1024
    $region81: #{tpu_custom_call.1} parent=1 // pred_fallthru
      _
    // Predicated region
    $region82: #{tpu_custom_call.1} parent=1 // pred_check
      _
    $region83: #{tpu_custom_call.1} parent=1 // pred_check_branch
      %228 = sbr.rel (0) target = $region85
    $region84: #{tpu_custom_call.1} parent=1 // pred_region
      %229 = dma.done [#allocation9], 1024
    $region85: #{tpu_custom_call.1} parent=1 // pred_fallthru
      _
    // Predicated region
    $region86: #{tpu_custom_call.1} parent=1 // pred_check
      _
    $region87: #{tpu_custom_call.1} parent=1 // pred_check_branch
      %231 = sbr.rel (0) target = $region89
    $region88: #{tpu_custom_call.1} parent=1 // pred_region
      %232 = dma.done [#allocation9], 1024
    $region89: #{tpu_custom_call.1} parent=1 // pred_fallthru
      _
    // Predicated region
    $region90: #{tpu_custom_call.1} parent=1 // pred_check
      _
    $region91: #{tpu_custom_call.1} parent=1 // pred_check_branch
      %234 = sbr.rel (0) target = $region93
    $region92: #{tpu_custom_call.1} parent=1 // pred_region
      %235 = dma.done [#allocation12], 1024
    $region93: #{tpu_custom_call.1} parent=1 // pred_fallthru
      _
    // Predicated region
    $region94: #{tpu_custom_call.1} parent=1 // pred_check
      _
    $region95: #{tpu_custom_call.1} parent=1 // pred_check_branch
      %237 = sbr.rel (0) target = $region97
    $region96: #{tpu_custom_call.1} parent=1 // pred_region
      %238 = dma.done [#allocation12], 1024
    $region97: #{tpu_custom_call.1} parent=1 // pred_fallthru
      _
    // Predicated region
    $region98: #{tpu_custom_call.1} parent=1 // pred_check
      _
    $region99: #{tpu_custom_call.1} parent=1 // pred_check_branch
      %240 = sbr.rel (0) target = $region101
    $region100: #{tpu_custom_call.1} parent=1 // pred_region
      %241 = dma.done [#allocation15], 1024
    $region101: #{tpu_custom_call.1} parent=1 // pred_fallthru
      _
    // Predicated region
    $region102: #{tpu_custom_call.1} parent=1 // pred_check
      _
    $region103: #{tpu_custom_call.1} parent=1 // pred_check_branch
      %243 = sbr.rel (0) target = $region105
    $region104: #{tpu_custom_call.1} parent=1 // pred_region
      %244 = dma.done [#allocation15], 1024
    $region105: #{tpu_custom_call.1} parent=1 // pred_fallthru
      _
    // Predicated region
    $region106: #{tpu_custom_call.1} parent=1 // pred_check
      _
    $region107: #{tpu_custom_call.1} parent=1 // pred_check_branch
      %246 = sbr.rel (0) target = $region109
    $region108: #{tpu_custom_call.1} parent=1 // pred_region
      %247 = dma.done [#allocation18], 16
    $region109: #{tpu_custom_call.1} parent=1 // pred_fallthru
      _
    // Predicated region
    $region110: #{tpu_custom_call.1} parent=1 // pred_check
      _
    $region111: #{tpu_custom_call.1} parent=1 // pred_check_branch
      %249 = sbr.rel (0) target = $region113
    $region112: #{tpu_custom_call.1} parent=1 // pred_region
      %250 = dma.done [#allocation18], 16
    $region113: #{tpu_custom_call.1} parent=1 // pred_fallthru
      _
    // Predicated region
    $region114: #{tpu_custom_call.1} parent=1 // pred_check
      _
    $region115: #{tpu_custom_call.1} parent=1 // pred_check_branch
      %252 = sbr.rel (0) target = $region117
    $region116: #{tpu_custom_call.1} parent=1 // pred_region
      %253 = dma.done [#allocation21], 16
    $region117: #{tpu_custom_call.1} parent=1 // pred_fallthru
      _
    // Predicated region
    $region118: #{tpu_custom_call.1} parent=1 // pred_check
      _
    $region119: #{tpu_custom_call.1} parent=1 // pred_check_branch
      %255 = sbr.rel (0) target = $region121
    $region120: #{tpu_custom_call.1} parent=1 // pred_region
      %256 = dma.done [#allocation21], 16
    $region121: #{tpu_custom_call.1} parent=1 // pred_fallthru
      _
    // Predicated region
    $region122: #{tpu_custom_call.1} parent=1 // pred_check
      _
    $region123: #{tpu_custom_call.1} parent=1 // pred_check_branch
      %258 = sbr.rel (0) target = $region125
    $region124: #{tpu_custom_call.1} parent=1 // pred_region
      %259 = dma.done [#allocation24], 16
    $region125: #{tpu_custom_call.1} parent=1 // pred_fallthru
      _
    // Predicated region
    $region126: #{tpu_custom_call.1} parent=1 // pred_check
      _
    $region127: #{tpu_custom_call.1} parent=1 // pred_check_branch
      %261 = sbr.rel (0) target = $region129
    $region128: #{tpu_custom_call.1} parent=1 // pred_region
      %262 = dma.done [#allocation24], 16
    $region129: #{tpu_custom_call.1} parent=1 // pred_fallthru
      _
    // Predicated region
    $region130: #{tpu_custom_call.1} parent=1 // pred_check
      _
    $region131: #{tpu_custom_call.1} parent=1 // pred_check_branch
      %264 = sbr.rel (0) target = $region133
    $region132: #{tpu_custom_call.1} parent=1 // pred_region
      %265 = dma.done [#allocation27], 16
    $region133: #{tpu_custom_call.1} parent=1 // pred_fallthru
      _
    // Predicated region
    $region134: #{tpu_custom_call.1} parent=1 // pred_check
      _
    $region135: #{tpu_custom_call.1} parent=1 // pred_check_branch
      %267 = sbr.rel (0) target = $region137
    $region136: #{tpu_custom_call.1} parent=1 // pred_region
      %268 = dma.done [#allocation27], 16
    $region137: #{tpu_custom_call.1} parent=1 // pred_fallthru
      _
    %v270 = vld [vmem:[#allocation2] sm:$0xff]
    %v271 = vmul.f32 %v270, %v270
    %272 = vadd.xlane.f32.xlu0 %v271
    %v273 = vpop.xlane.xlu0 %272
    %v274 = vmul.f32 %v273, 0.03125
    %v275 = vadd.f32 %v274, 1e-08
    %v276 = vrsqrt.pop %v275
    %v277 = vmul.f32 %v270, %v276
    %v278 = vpack.c.bf16 %v277, %v277
    %v279 = vld [vmem:[#allocation5] sm:$0xf]
    %v280 = vld [vmem:[#allocation5 + $0x4] sm:$0xf]
    %v281 = vld [vmem:[#allocation5 + $0x8] sm:$0xf]
    %v282 = vld [vmem:[#allocation5 + $0xc] sm:$0xf]
    %v283 = vld [vmem:[#allocation5 + $0x10] sm:$0xf]
    %v284 = vld [vmem:[#allocation5 + $0x14] sm:$0xf]
    %v285 = vld [vmem:[#allocation5 + $0x18] sm:$0xf]
    %v286 = vld [vmem:[#allocation5 + $0x1c] sm:$0xf]
    %v287 = vld [vmem:[#allocation5 + $0x20] sm:$0xf]
    %v288 = vld [vmem:[#allocation5 + $0x24] sm:$0xf]
    %v289 = vld [vmem:[#allocation5 + $0x28] sm:$0xf]
    %v290 = vld [vmem:[#allocation5 + $0x2c] sm:$0xf]
    %v291 = vld [vmem:[#allocation5 + $0x30] sm:$0xf]
    %v292 = vld [vmem:[#allocation5 + $0x34] sm:$0xf]
    %v293 = vld [vmem:[#allocation5 + $0x38] sm:$0xf]
    %v294 = vld [vmem:[#allocation5 + $0x3c] sm:$0xf]
    %v295 = vld [vmem:[#allocation17] sm:$0x1]
    %v297 = vlaneseq
    %v298 = vshrl.u32 %v297, 7
    %v299 = vsub.s32 0, %v298
    %v300 = vrot.slane %v295, %v299
    %v318 = vunpack.c.l.b16 %v279
    %v319 = vunpack.c.l.b16 %v280
    %v320 = vunpack.c.l.b16 %v281
    %v321 = vunpack.c.l.b16 %v282
    %v322 = vunpack.c.l.b16 %v283
    %v323 = vunpack.c.l.b16 %v284
    %v324 = vunpack.c.l.b16 %v285
    %v325 = vunpack.c.l.b16 %v286
    %v326 = vunpack.c.l.b16 %v287
    %v327 = vunpack.c.l.b16 %v288
    %v328 = vunpack.c.l.b16 %v289
    %v329 = vunpack.c.l.b16 %v290
    %v330 = vunpack.c.l.b16 %v291
    %v331 = vunpack.c.l.b16 %v292
    %v332 = vunpack.c.l.b16 %v293
    %v333 = vunpack.c.l.b16 %v294
    %v334 = vpack.c.b16 %v319, %v318
    %v335 = vpack.c.b16 %v321, %v320
    %v336 = vpack.c.b16 %v323, %v322
    %v337 = vpack.c.b16 %v325, %v324
    %v338 = vpack.c.b16 %v327, %v326
    %v339 = vpack.c.b16 %v329, %v328
    %v340 = vpack.c.b16 %v331, %v330
    %v341 = vpack.c.b16 %v333, %v332
    %350 = vmatprep.subr.bf16.mxu0 0
    %351 = vmatpush1.bf16.msra.mxu0 %v334
    %352 = vmatprep.subr.bf16.mxu0 0
    %353 = vmatpush1.bf16.msra.mxu0 %v335
    %354 = vmatprep.subr.bf16.mxu0 0
    %355 = vmatpush1.bf16.msra.mxu0 %v336
    %356 = vmatprep.subr.bf16.mxu0 0
    %357 = vmatpush1.bf16.msra.mxu0 %v337
    %358 = vmatprep.subr.bf16.mxu0 0
    %359 = vmatpush1.bf16.msra.mxu0 %v338
    %360 = vmatprep.subr.bf16.mxu0 0
    %361 = vmatpush1.bf16.msra.mxu0 %v339
    %362 = vmatprep.subr.bf16.mxu0 0
    %363 = vmatpush1.bf16.msra.mxu0 %v340
    %364 = vmatprep.subr.bf16.mxu0 0
    %365 = vmatpush1.bf16.msra.mxu0 %v341
    %366 = vmatprep.subr.bf16.mxu0 0
    %367 = vmatpush1.bf16.msra.mxu0 0
    %368 = vmatprep.subr.bf16.mxu0 0
    %369 = vmatpush1.bf16.msra.mxu0 0
    %370 = vmatprep.subr.bf16.mxu0 0
    %371 = vmatpush1.bf16.msra.mxu0 0
    %372 = vmatprep.subr.bf16.mxu0 0
    %373 = vmatpush1.bf16.msra.mxu0 0
    %374 = vmatprep.subr.bf16.mxu0 0
    %375 = vmatpush1.bf16.msra.mxu0 0
    %376 = vmatprep.subr.bf16.mxu0 0
    %377 = vmatpush1.bf16.msra.mxu0 0
    %378 = vmatprep.subr.bf16.mxu0 0
    %379 = vmatpush1.bf16.msra.mxu0 0
    %380 = vmatprep.subr.bf16.mxu0 0
    %381 = vmatpush1.bf16.msra.mxu0 0
    %382 = vmatprep.mubr.bf16.mxu0 0
    %383 = vmatmul.mubr.bf16.gmra.mrb[0].mxu0 %v278
    %v384 = vpop.f32.mrb[0].mxu0
    %v385 = vadd.f32 %v300, %v384
    %v386 = vpop.f32.mrb[0].mxu0
    %v387 = vpop.f32.mrb[0].mxu0
    %v388 = vpop.f32.mrb[0].mxu0
    %389 = vdwg.mxu0
    %vm390 = vcmp.ge.f32.partialorder %v385, 0.0
    %v391 = vmul.f32 %v385, 0.01
    %v392 = vsel %vm390, %v385, %v391
    %v393 = vpack.c.bf16 %v392, %v392
    %v394 = vld [vmem:[#allocation7] sm:$0xf]
    %v395 = vld [vmem:[#allocation7 + $0x4] sm:$0xf]
    %v396 = vld [vmem:[#allocation7 + $0x8] sm:$0xf]
    %v397 = vld [vmem:[#allocation7 + $0xc] sm:$0xf]
    %v398 = vld [vmem:[#allocation7 + $0x10] sm:$0xf]
    %v399 = vld [vmem:[#allocation7 + $0x14] sm:$0xf]
    %v400 = vld [vmem:[#allocation7 + $0x18] sm:$0xf]
    %v401 = vld [vmem:[#allocation7 + $0x1c] sm:$0xf]
    %v402 = vld [vmem:[#allocation7 + $0x20] sm:$0xf]
    %v403 = vld [vmem:[#allocation7 + $0x24] sm:$0xf]
    %v404 = vld [vmem:[#allocation7 + $0x28] sm:$0xf]
    %v405 = vld [vmem:[#allocation7 + $0x2c] sm:$0xf]
    %v406 = vld [vmem:[#allocation7 + $0x30] sm:$0xf]
    %v407 = vld [vmem:[#allocation7 + $0x34] sm:$0xf]
    %v408 = vld [vmem:[#allocation7 + $0x38] sm:$0xf]
    %v409 = vld [vmem:[#allocation7 + $0x3c] sm:$0xf]
    %v410 = vld [vmem:[#allocation19] sm:$0x1]
    %v412 = vlaneseq
    %v413 = vshrl.u32 %v412, 7
    %v414 = vsub.s32 0, %v413
    %v415 = vrot.slane %v410, %v414
    %v433 = vunpack.c.l.b16 %v394
    %v434 = vunpack.c.l.b16 %v395
    %v435 = vunpack.c.l.b16 %v396
    %v436 = vunpack.c.l.b16 %v397
    %v437 = vunpack.c.l.b16 %v398
    %v438 = vunpack.c.l.b16 %v399
    %v439 = vunpack.c.l.b16 %v400
    %v440 = vunpack.c.l.b16 %v401
    %v441 = vunpack.c.l.b16 %v402
    %v442 = vunpack.c.l.b16 %v403
    %v443 = vunpack.c.l.b16 %v404
    %v444 = vunpack.c.l.b16 %v405
    %v445 = vunpack.c.l.b16 %v406
    %v446 = vunpack.c.l.b16 %v407
    %v447 = vunpack.c.l.b16 %v408
    %v448 = vunpack.c.l.b16 %v409
    %v449 = vpack.c.b16 %v434, %v433
    %v450 = vpack.c.b16 %v436, %v435
    %v451 = vpack.c.b16 %v438, %v437
    %v452 = vpack.c.b16 %v440, %v439
    %v453 = vpack.c.b16 %v442, %v441
    %v454 = vpack.c.b16 %v444, %v443
    %v455 = vpack.c.b16 %v446, %v445
    %v456 = vpack.c.b16 %v448, %v447
    %465 = vmatprep.subr.bf16.mxu0 0
    %466 = vmatpush1.bf16.msra.mxu0 %v449
    %467 = vmatprep.subr.bf16.mxu0 0
    %468 = vmatpush1.bf16.msra.mxu0 %v450
    %469 = vmatprep.subr.bf16.mxu0 0
    %470 = vmatpush1.bf16.msra.mxu0 %v451
    %471 = vmatprep.subr.bf16.mxu0 0
    %472 = vmatpush1.bf16.msra.mxu0 %v452
    %473 = vmatprep.subr.bf16.mxu0 0
    %474 = vmatpush1.bf16.msra.mxu0 %v453
    %475 = vmatprep.subr.bf16.mxu0 0
    %476 = vmatpush1.bf16.msra.mxu0 %v454
    %477 = vmatprep.subr.bf16.mxu0 0
    %478 = vmatpush1.bf16.msra.mxu0 %v455
    %479 = vmatprep.subr.bf16.mxu0 0
    %480 = vmatpush1.bf16.msra.mxu0 %v456
    %481 = vmatprep.subr.bf16.mxu0 0
    %482 = vmatpush1.bf16.msra.mxu0 0
    %483 = vmatprep.subr.bf16.mxu0 0
    %484 = vmatpush1.bf16.msra.mxu0 0
    %485 = vmatprep.subr.bf16.mxu0 0
    %486 = vmatpush1.bf16.msra.mxu0 0
    %487 = vmatprep.subr.bf16.mxu0 0
    %488 = vmatpush1.bf16.msra.mxu0 0
    %489 = vmatprep.subr.bf16.mxu0 0
    %490 = vmatpush1.bf16.msra.mxu0 0
    %491 = vmatprep.subr.bf16.mxu0 0
    %492 = vmatpush1.bf16.msra.mxu0 0
    %493 = vmatprep.subr.bf16.mxu0 0
    %494 = vmatpush1.bf16.msra.mxu0 0
    %495 = vmatprep.subr.bf16.mxu0 0
    %496 = vmatpush1.bf16.msra.mxu0 0
    %497 = vmatprep.mubr.bf16.mxu0 0
    %498 = vmatmul.mubr.bf16.gmra.mrb[0].mxu0 %v393
    %v499 = vpop.f32.mrb[0].mxu0
    %v500 = vadd.f32 %v415, %v499
    %v501 = vpop.f32.mrb[0].mxu0
    %v502 = vpop.f32.mrb[0].mxu0
    %v503 = vpop.f32.mrb[0].mxu0
    %504 = vdwg.mxu0
    %vm505 = vcmp.ge.f32.partialorder %v500, 0.0
    %v506 = vmul.f32 %v500, 0.2
    %v507 = vsel %vm505, %v500, %v506
    %v508 = vpack.c.bf16 %v507, %v507
    %v509 = vld [vmem:[#allocation8] sm:$0xf]
    %v510 = vld [vmem:[#allocation8 + $0x4] sm:$0xf]
    %v511 = vld [vmem:[#allocation8 + $0x8] sm:$0xf]
    %v512 = vld [vmem:[#allocation8 + $0xc] sm:$0xf]
    %v513 = vld [vmem:[#allocation8 + $0x10] sm:$0xf]
    %v514 = vld [vmem:[#allocation8 + $0x14] sm:$0xf]
    %v515 = vld [vmem:[#allocation8 + $0x18] sm:$0xf]
    %v516 = vld [vmem:[#allocation8 + $0x1c] sm:$0xf]
    %v517 = vld [vmem:[#allocation8 + $0x20] sm:$0xf]
    %v518 = vld [vmem:[#allocation8 + $0x24] sm:$0xf]
    %v519 = vld [vmem:[#allocation8 + $0x28] sm:$0xf]
    %v520 = vld [vmem:[#allocation8 + $0x2c] sm:$0xf]
    %v521 = vld [vmem:[#allocation8 + $0x30] sm:$0xf]
    %v522 = vld [vmem:[#allocation8 + $0x34] sm:$0xf]
    %v523 = vld [vmem:[#allocation8 + $0x38] sm:$0xf]
    %v524 = vld [vmem:[#allocation8 + $0x3c] sm:$0xf]
    %v525 = vld [vmem:[#allocation20] sm:$0x1]
    %v527 = vlaneseq
    %v528 = vshrl.u32 %v527, 7
    %v529 = vsub.s32 0, %v528
    %v530 = vrot.slane %v525, %v529
    %v548 = vunpack.c.l.b16 %v509
    %v549 = vunpack.c.l.b16 %v510
    %v550 = vunpack.c.l.b16 %v511
    %v551 = vunpack.c.l.b16 %v512
    %v552 = vunpack.c.l.b16 %v513
    %v553 = vunpack.c.l.b16 %v514
    %v554 = vunpack.c.l.b16 %v515
    %v555 = vunpack.c.l.b16 %v516
    %v556 = vunpack.c.l.b16 %v517
    %v557 = vunpack.c.l.b16 %v518
    %v558 = vunpack.c.l.b16 %v519
    %v559 = vunpack.c.l.b16 %v520
    %v560 = vunpack.c.l.b16 %v521
    %v561 = vunpack.c.l.b16 %v522
    %v562 = vunpack.c.l.b16 %v523
    %v563 = vunpack.c.l.b16 %v524
    %v564 = vpack.c.b16 %v549, %v548
    %v565 = vpack.c.b16 %v551, %v550
    %v566 = vpack.c.b16 %v553, %v552
    %v567 = vpack.c.b16 %v555, %v554
    %v568 = vpack.c.b16 %v557, %v556
    %v569 = vpack.c.b16 %v559, %v558
    %v570 = vpack.c.b16 %v561, %v560
    %v571 = vpack.c.b16 %v563, %v562
    %580 = vmatprep.subr.bf16.mxu0 0
    %581 = vmatpush1.bf16.msra.mxu0 %v564
    %582 = vmatprep.subr.bf16.mxu0 0
    %583 = vmatpush1.bf16.msra.mxu0 %v565
    %584 = vmatprep.subr.bf16.mxu0 0
    %585 = vmatpush1.bf16.msra.mxu0 %v566
    %586 = vmatprep.subr.bf16.mxu0 0
    %587 = vmatpush1.bf16.msra.mxu0 %v567
    %588 = vmatprep.subr.bf16.mxu0 0
    %589 = vmatpush1.bf16.msra.mxu0 %v568
    %590 = vmatprep.subr.bf16.mxu0 0
    %591 = vmatpush1.bf16.msra.mxu0 %v569
    %592 = vmatprep.subr.bf16.mxu0 0
    %593 = vmatpush1.bf16.msra.mxu0 %v570
    %594 = vmatprep.subr.bf16.mxu0 0
    %595 = vmatpush1.bf16.msra.mxu0 %v571
    %596 = vmatprep.subr.bf16.mxu0 0
    %597 = vmatpush1.bf16.msra.mxu0 0
    %598 = vmatprep.subr.bf16.mxu0 0
    %599 = vmatpush1.bf16.msra.mxu0 0
    %600 = vmatprep.subr.bf16.mxu0 0
    %601 = vmatpush1.bf16.msra.mxu0 0
    %602 = vmatprep.subr.bf16.mxu0 0
    %603 = vmatpush1.bf16.msra.mxu0 0
    %604 = vmatprep.subr.bf16.mxu0 0
    %605 = vmatpush1.bf16.msra.mxu0 0
    %606 = vmatprep.subr.bf16.mxu0 0
    %607 = vmatpush1.bf16.msra.mxu0 0
    %608 = vmatprep.subr.bf16.mxu0 0
    %609 = vmatpush1.bf16.msra.mxu0 0
    %610 = vmatprep.subr.bf16.mxu0 0
    %611 = vmatpush1.bf16.msra.mxu0 0
    %612 = vmatprep.mubr.bf16.mxu0 0
    %613 = vmatmul.mubr.bf16.gmra.mrb[0].mxu0 %v508
    %v614 = vpop.f32.mrb[0].mxu0
    %v615 = vadd.f32 %v530, %v614
    %v616 = vpop.f32.mrb[0].mxu0
    %v617 = vpop.f32.mrb[0].mxu0
    %v618 = vpop.f32.mrb[0].mxu0
    %619 = vdwg.mxu0
    %vm620 = vcmp.ge.f32.partialorder %v615, 0.0
    %v621 = vmul.f32 %v615, 0.2
    %v622 = vsel %vm620, %v615, %v621
    %v623 = vpack.c.bf16 %v622, %v622
    %v624 = vld [vmem:[#allocation10] sm:$0xf]
    %v625 = vld [vmem:[#allocation10 + $0x4] sm:$0xf]
    %v626 = vld [vmem:[#allocation10 + $0x8] sm:$0xf]
    %v627 = vld [vmem:[#allocation10 + $0xc] sm:$0xf]
    %v628 = vld [vmem:[#allocation10 + $0x10] sm:$0xf]
    %v629 = vld [vmem:[#allocation10 + $0x14] sm:$0xf]
    %v630 = vld [vmem:[#allocation10 + $0x18] sm:$0xf]
    %v631 = vld [vmem:[#allocation10 + $0x1c] sm:$0xf]
    %v632 = vld [vmem:[#allocation10 + $0x20] sm:$0xf]
    %v633 = vld [vmem:[#allocation10 + $0x24] sm:$0xf]
    %v634 = vld [vmem:[#allocation10 + $0x28] sm:$0xf]
    %v635 = vld [vmem:[#allocation10 + $0x2c] sm:$0xf]
    %v636 = vld [vmem:[#allocation10 + $0x30] sm:$0xf]
    %v637 = vld [vmem:[#allocation10 + $0x34] sm:$0xf]
    %v638 = vld [vmem:[#allocation10 + $0x38] sm:$0xf]
    %v639 = vld [vmem:[#allocation10 + $0x3c] sm:$0xf]
    %v640 = vld [vmem:[#allocation22] sm:$0x1]
    %v642 = vlaneseq
    %v643 = vshrl.u32 %v642, 7
    %v644 = vsub.s32 0, %v643
    %v645 = vrot.slane %v640, %v644
    %v663 = vunpack.c.l.b16 %v624
    %v664 = vunpack.c.l.b16 %v625
    %v665 = vunpack.c.l.b16 %v626
    %v666 = vunpack.c.l.b16 %v627
    %v667 = vunpack.c.l.b16 %v628
    %v668 = vunpack.c.l.b16 %v629
    %v669 = vunpack.c.l.b16 %v630
    %v670 = vunpack.c.l.b16 %v631
    %v671 = vunpack.c.l.b16 %v632
    %v672 = vunpack.c.l.b16 %v633
    %v673 = vunpack.c.l.b16 %v634
    %v674 = vunpack.c.l.b16 %v635
    %v675 = vunpack.c.l.b16 %v636
    %v676 = vunpack.c.l.b16 %v637
    %v677 = vunpack.c.l.b16 %v638
    %v678 = vunpack.c.l.b16 %v639
    %v679 = vpack.c.b16 %v664, %v663
    %v680 = vpack.c.b16 %v666, %v665
    %v681 = vpack.c.b16 %v668, %v667
    %v682 = vpack.c.b16 %v670, %v669
    %v683 = vpack.c.b16 %v672, %v671
    %v684 = vpack.c.b16 %v674, %v673
    %v685 = vpack.c.b16 %v676, %v675
    %v686 = vpack.c.b16 %v678, %v677
    %695 = vmatprep.subr.bf16.mxu0 0
    %696 = vmatpush1.bf16.msra.mxu0 %v679
    %697 = vmatprep.subr.bf16.mxu0 0
    %698 = vmatpush1.bf16.msra.mxu0 %v680
    %699 = vmatprep.subr.bf16.mxu0 0
    %700 = vmatpush1.bf16.msra.mxu0 %v681
    %701 = vmatprep.subr.bf16.mxu0 0
    %702 = vmatpush1.bf16.msra.mxu0 %v682
    %703 = vmatprep.subr.bf16.mxu0 0
    %704 = vmatpush1.bf16.msra.mxu0 %v683
    %705 = vmatprep.subr.bf16.mxu0 0
    %706 = vmatpush1.bf16.msra.mxu0 %v684
    %707 = vmatprep.subr.bf16.mxu0 0
    %708 = vmatpush1.bf16.msra.mxu0 %v685
    %709 = vmatprep.subr.bf16.mxu0 0
    %710 = vmatpush1.bf16.msra.mxu0 %v686
    %711 = vmatprep.subr.bf16.mxu0 0
    %712 = vmatpush1.bf16.msra.mxu0 0
    %713 = vmatprep.subr.bf16.mxu0 0
    %714 = vmatpush1.bf16.msra.mxu0 0
    %715 = vmatprep.subr.bf16.mxu0 0
    %716 = vmatpush1.bf16.msra.mxu0 0
    %717 = vmatprep.subr.bf16.mxu0 0
    %718 = vmatpush1.bf16.msra.mxu0 0
    %719 = vmatprep.subr.bf16.mxu0 0
    %720 = vmatpush1.bf16.msra.mxu0 0
    %721 = vmatprep.subr.bf16.mxu0 0
    %722 = vmatpush1.bf16.msra.mxu0 0
    %723 = vmatprep.subr.bf16.mxu0 0
    %724 = vmatpush1.bf16.msra.mxu0 0
    %725 = vmatprep.subr.bf16.mxu0 0
    %726 = vmatpush1.bf16.msra.mxu0 0
    %727 = vmatprep.mubr.bf16.mxu0 0
    %728 = vmatmul.mubr.bf16.gmra.mrb[0].mxu0 %v623
    %v729 = vpop.f32.mrb[0].mxu0
    %v730 = vadd.f32 %v645, %v729
    %v731 = vpop.f32.mrb[0].mxu0
    %v732 = vpop.f32.mrb[0].mxu0
    %v733 = vpop.f32.mrb[0].mxu0
    %734 = vdwg.mxu0
    %vm735 = vcmp.ge.f32.partialorder %v730, 0.0
    %v736 = vmul.f32 %v730, 0.2
    %v737 = vsel %vm735, %v730, %v736
    %v738 = vpack.c.bf16 %v737, %v737
    %v739 = vld [vmem:[#allocation11] sm:$0xf]
    %v740 = vld [vmem:[#allocation11 + $0x4] sm:$0xf]
    %v741 = vld [vmem:[#allocation11 + $0x8] sm:$0xf]
    %v742 = vld [vmem:[#allocation11 + $0xc] sm:$0xf]
    %v743 = vld [vmem:[#allocation11 + $0x10] sm:$0xf]
    %v744 = vld [vmem:[#allocation11 + $0x14] sm:$0xf]
    %v745 = vld [vmem:[#allocation11 + $0x18] sm:$0xf]
    %v746 = vld [vmem:[#allocation11 + $0x1c] sm:$0xf]
    %v747 = vld [vmem:[#allocation11 + $0x20] sm:$0xf]
    %v748 = vld [vmem:[#allocation11 + $0x24] sm:$0xf]
    %v749 = vld [vmem:[#allocation11 + $0x28] sm:$0xf]
    %v750 = vld [vmem:[#allocation11 + $0x2c] sm:$0xf]
    %v751 = vld [vmem:[#allocation11 + $0x30] sm:$0xf]
    %v752 = vld [vmem:[#allocation11 + $0x34] sm:$0xf]
    %v753 = vld [vmem:[#allocation11 + $0x38] sm:$0xf]
    %v754 = vld [vmem:[#allocation11 + $0x3c] sm:$0xf]
    %v755 = vld [vmem:[#allocation23] sm:$0x1]
    %v757 = vlaneseq
    %v758 = vshrl.u32 %v757, 7
    %v759 = vsub.s32 0, %v758
    %v760 = vrot.slane %v755, %v759
    %v778 = vunpack.c.l.b16 %v739
    %v779 = vunpack.c.l.b16 %v740
    %v780 = vunpack.c.l.b16 %v741
    %v781 = vunpack.c.l.b16 %v742
    %v782 = vunpack.c.l.b16 %v743
    %v783 = vunpack.c.l.b16 %v744
    %v784 = vunpack.c.l.b16 %v745
    %v785 = vunpack.c.l.b16 %v746
    %v786 = vunpack.c.l.b16 %v747
    %v787 = vunpack.c.l.b16 %v748
    %v788 = vunpack.c.l.b16 %v749
    %v789 = vunpack.c.l.b16 %v750
    %v790 = vunpack.c.l.b16 %v751
    %v791 = vunpack.c.l.b16 %v752
    %v792 = vunpack.c.l.b16 %v753
    %v793 = vunpack.c.l.b16 %v754
    %v794 = vpack.c.b16 %v779, %v778
    %v795 = vpack.c.b16 %v781, %v780
    %v796 = vpack.c.b16 %v783, %v782
    %v797 = vpack.c.b16 %v785, %v784
    %v798 = vpack.c.b16 %v787, %v786
    %v799 = vpack.c.b16 %v789, %v788
    %v800 = vpack.c.b16 %v791, %v790
    %v801 = vpack.c.b16 %v793, %v792
    %810 = vmatprep.subr.bf16.mxu0 0
    %811 = vmatpush1.bf16.msra.mxu0 %v794
    %812 = vmatprep.subr.bf16.mxu0 0
    %813 = vmatpush1.bf16.msra.mxu0 %v795
    %814 = vmatprep.subr.bf16.mxu0 0
    %815 = vmatpush1.bf16.msra.mxu0 %v796
    %816 = vmatprep.subr.bf16.mxu0 0
    %817 = vmatpush1.bf16.msra.mxu0 %v797
    %818 = vmatprep.subr.bf16.mxu0 0
    %819 = vmatpush1.bf16.msra.mxu0 %v798
    %820 = vmatprep.subr.bf16.mxu0 0
    %821 = vmatpush1.bf16.msra.mxu0 %v799
    %822 = vmatprep.subr.bf16.mxu0 0
    %823 = vmatpush1.bf16.msra.mxu0 %v800
    %824 = vmatprep.subr.bf16.mxu0 0
    %825 = vmatpush1.bf16.msra.mxu0 %v801
    %826 = vmatprep.subr.bf16.mxu0 0
    %827 = vmatpush1.bf16.msra.mxu0 0
    %828 = vmatprep.subr.bf16.mxu0 0
    %829 = vmatpush1.bf16.msra.mxu0 0
    %830 = vmatprep.subr.bf16.mxu0 0
    %831 = vmatpush1.bf16.msra.mxu0 0
    %832 = vmatprep.subr.bf16.mxu0 0
    %833 = vmatpush1.bf16.msra.mxu0 0
    %834 = vmatprep.subr.bf16.mxu0 0
    %835 = vmatpush1.bf16.msra.mxu0 0
    %836 = vmatprep.subr.bf16.mxu0 0
    %837 = vmatpush1.bf16.msra.mxu0 0
    %838 = vmatprep.subr.bf16.mxu0 0
    %839 = vmatpush1.bf16.msra.mxu0 0
    %840 = vmatprep.subr.bf16.mxu0 0
    %841 = vmatpush1.bf16.msra.mxu0 0
    %842 = vmatprep.mubr.bf16.mxu0 0
    %843 = vmatmul.mubr.bf16.gmra.mrb[0].mxu0 %v738
    %v844 = vpop.f32.mrb[0].mxu0
    %v845 = vadd.f32 %v760, %v844
    %v846 = vpop.f32.mrb[0].mxu0
    %v847 = vpop.f32.mrb[0].mxu0
    %v848 = vpop.f32.mrb[0].mxu0
    %849 = vdwg.mxu0
    %vm850 = vcmp.ge.f32.partialorder %v845, 0.0
    %v851 = vmul.f32 %v845, 0.2
    %v852 = vsel %vm850, %v845, %v851
    %v853 = vpack.c.bf16 %v852, %v852
    %v854 = vld [vmem:[#allocation13] sm:$0xf]
    %v855 = vld [vmem:[#allocation13 + $0x4] sm:$0xf]
    %v856 = vld [vmem:[#allocation13 + $0x8] sm:$0xf]
    %v857 = vld [vmem:[#allocation13 + $0xc] sm:$0xf]
    %v858 = vld [vmem:[#allocation13 + $0x10] sm:$0xf]
    %v859 = vld [vmem:[#allocation13 + $0x14] sm:$0xf]
    %v860 = vld [vmem:[#allocation13 + $0x18] sm:$0xf]
    %v861 = vld [vmem:[#allocation13 + $0x1c] sm:$0xf]
    %v862 = vld [vmem:[#allocation13 + $0x20] sm:$0xf]
    %v863 = vld [vmem:[#allocation13 + $0x24] sm:$0xf]
    %v864 = vld [vmem:[#allocation13 + $0x28] sm:$0xf]
    %v865 = vld [vmem:[#allocation13 + $0x2c] sm:$0xf]
    %v866 = vld [vmem:[#allocation13 + $0x30] sm:$0xf]
    %v867 = vld [vmem:[#allocation13 + $0x34] sm:$0xf]
    %v868 = vld [vmem:[#allocation13 + $0x38] sm:$0xf]
    %v869 = vld [vmem:[#allocation13 + $0x3c] sm:$0xf]
    %v870 = vld [vmem:[#allocation25] sm:$0x1]
    %v872 = vlaneseq
    %v873 = vshrl.u32 %v872, 7
    %v874 = vsub.s32 0, %v873
    %v875 = vrot.slane %v870, %v874
    %v893 = vunpack.c.l.b16 %v854
    %v894 = vunpack.c.l.b16 %v855
    %v895 = vunpack.c.l.b16 %v856
    %v896 = vunpack.c.l.b16 %v857
    %v897 = vunpack.c.l.b16 %v858
    %v898 = vunpack.c.l.b16 %v859
    %v899 = vunpack.c.l.b16 %v860
    %v900 = vunpack.c.l.b16 %v861
    %v901 = vunpack.c.l.b16 %v862
    %v902 = vunpack.c.l.b16 %v863
    %v903 = vunpack.c.l.b16 %v864
    %v904 = vunpack.c.l.b16 %v865
    %v905 = vunpack.c.l.b16 %v866
    %v906 = vunpack.c.l.b16 %v867
    %v907 = vunpack.c.l.b16 %v868
    %v908 = vunpack.c.l.b16 %v869
    %v909 = vpack.c.b16 %v894, %v893
    %v910 = vpack.c.b16 %v896, %v895
    %v911 = vpack.c.b16 %v898, %v897
    %v912 = vpack.c.b16 %v900, %v899
    %v913 = vpack.c.b16 %v902, %v901
    %v914 = vpack.c.b16 %v904, %v903
    %v915 = vpack.c.b16 %v906, %v905
    %v916 = vpack.c.b16 %v908, %v907
    %925 = vmatprep.subr.bf16.mxu0 0
    %926 = vmatpush1.bf16.msra.mxu0 %v909
    %927 = vmatprep.subr.bf16.mxu0 0
    %928 = vmatpush1.bf16.msra.mxu0 %v910
    %929 = vmatprep.subr.bf16.mxu0 0
    %930 = vmatpush1.bf16.msra.mxu0 %v911
    %931 = vmatprep.subr.bf16.mxu0 0
    %932 = vmatpush1.bf16.msra.mxu0 %v912
    %933 = vmatprep.subr.bf16.mxu0 0
    %934 = vmatpush1.bf16.msra.mxu0 %v913
    %935 = vmatprep.subr.bf16.mxu0 0
    %936 = vmatpush1.bf16.msra.mxu0 %v914
    %937 = vmatprep.subr.bf16.mxu0 0
    %938 = vmatpush1.bf16.msra.mxu0 %v915
    %939 = vmatprep.subr.bf16.mxu0 0
    %940 = vmatpush1.bf16.msra.mxu0 %v916
    %941 = vmatprep.subr.bf16.mxu0 0
    %942 = vmatpush1.bf16.msra.mxu0 0
    %943 = vmatprep.subr.bf16.mxu0 0
    %944 = vmatpush1.bf16.msra.mxu0 0
    %945 = vmatprep.subr.bf16.mxu0 0
    %946 = vmatpush1.bf16.msra.mxu0 0
    %947 = vmatprep.subr.bf16.mxu0 0
    %948 = vmatpush1.bf16.msra.mxu0 0
    %949 = vmatprep.subr.bf16.mxu0 0
    %950 = vmatpush1.bf16.msra.mxu0 0
    %951 = vmatprep.subr.bf16.mxu0 0
    %952 = vmatpush1.bf16.msra.mxu0 0
    %953 = vmatprep.subr.bf16.mxu0 0
    %954 = vmatpush1.bf16.msra.mxu0 0
    %955 = vmatprep.subr.bf16.mxu0 0
    %956 = vmatpush1.bf16.msra.mxu0 0
    %957 = vmatprep.mubr.bf16.mxu0 0
    %958 = vmatmul.mubr.bf16.gmra.mrb[0].mxu0 %v853
    %v959 = vpop.f32.mrb[0].mxu0
    %v960 = vadd.f32 %v875, %v959
    %v961 = vpop.f32.mrb[0].mxu0
    %v962 = vpop.f32.mrb[0].mxu0
    %v963 = vpop.f32.mrb[0].mxu0
    %964 = vdwg.mxu0
    %vm965 = vcmp.ge.f32.partialorder %v960, 0.0
    %v966 = vmul.f32 %v960, 0.2
    %v967 = vsel %vm965, %v960, %v966
    %v968 = vpack.c.bf16 %v967, %v967
    %v969 = vld [vmem:[#allocation14] sm:$0xf]
    %v970 = vld [vmem:[#allocation14 + $0x4] sm:$0xf]
    %v971 = vld [vmem:[#allocation14 + $0x8] sm:$0xf]
    %v972 = vld [vmem:[#allocation14 + $0xc] sm:$0xf]
    %v973 = vld [vmem:[#allocation14 + $0x10] sm:$0xf]
    %v974 = vld [vmem:[#allocation14 + $0x14] sm:$0xf]
    %v975 = vld [vmem:[#allocation14 + $0x18] sm:$0xf]
    %v976 = vld [vmem:[#allocation14 + $0x1c] sm:$0xf]
    %v977 = vld [vmem:[#allocation14 + $0x20] sm:$0xf]
    %v978 = vld [vmem:[#allocation14 + $0x24] sm:$0xf]
    %v979 = vld [vmem:[#allocation14 + $0x28] sm:$0xf]
    %v980 = vld [vmem:[#allocation14 + $0x2c] sm:$0xf]
    %v981 = vld [vmem:[#allocation14 + $0x30] sm:$0xf]
    %v982 = vld [vmem:[#allocation14 + $0x34] sm:$0xf]
    %v983 = vld [vmem:[#allocation14 + $0x38] sm:$0xf]
    %v984 = vld [vmem:[#allocation14 + $0x3c] sm:$0xf]
    %v985 = vld [vmem:[#allocation26] sm:$0x1]
    %v987 = vlaneseq
    %v988 = vshrl.u32 %v987, 7
    %v989 = vsub.s32 0, %v988
    %v990 = vrot.slane %v985, %v989
    %v1008 = vunpack.c.l.b16 %v969
    %v1009 = vunpack.c.l.b16 %v970
    %v1010 = vunpack.c.l.b16 %v971
    %v1011 = vunpack.c.l.b16 %v972
    %v1012 = vunpack.c.l.b16 %v973
    %v1013 = vunpack.c.l.b16 %v974
    %v1014 = vunpack.c.l.b16 %v975
    %v1015 = vunpack.c.l.b16 %v976
    %v1016 = vunpack.c.l.b16 %v977
    %v1017 = vunpack.c.l.b16 %v978
    %v1018 = vunpack.c.l.b16 %v979
    %v1019 = vunpack.c.l.b16 %v980
    %v1020 = vunpack.c.l.b16 %v981
    %v1021 = vunpack.c.l.b16 %v982
    %v1022 = vunpack.c.l.b16 %v983
    %v1023 = vunpack.c.l.b16 %v984
    %v1024 = vpack.c.b16 %v1009, %v1008
    %v1025 = vpack.c.b16 %v1011, %v1010
    %v1026 = vpack.c.b16 %v1013, %v1012
    %v1027 = vpack.c.b16 %v1015, %v1014
    %v1028 = vpack.c.b16 %v1017, %v1016
    %v1029 = vpack.c.b16 %v1019, %v1018
    %v1030 = vpack.c.b16 %v1021, %v1020
    %v1031 = vpack.c.b16 %v1023, %v1022
    %1040 = vmatprep.subr.bf16.mxu0 0
    %1041 = vmatpush1.bf16.msra.mxu0 %v1024
    %1042 = vmatprep.subr.bf16.mxu0 0
    %1043 = vmatpush1.bf16.msra.mxu0 %v1025
    %1044 = vmatprep.subr.bf16.mxu0 0
    %1045 = vmatpush1.bf16.msra.mxu0 %v1026
    %1046 = vmatprep.subr.bf16.mxu0 0
    %1047 = vmatpush1.bf16.msra.mxu0 %v1027
    %1048 = vmatprep.subr.bf16.mxu0 0
    %1049 = vmatpush1.bf16.msra.mxu0 %v1028
    %1050 = vmatprep.subr.bf16.mxu0 0
    %1051 = vmatpush1.bf16.msra.mxu0 %v1029
    %1052 = vmatprep.subr.bf16.mxu0 0
    %1053 = vmatpush1.bf16.msra.mxu0 %v1030
    %1054 = vmatprep.subr.bf16.mxu0 0
    %1055 = vmatpush1.bf16.msra.mxu0 %v1031
    %1056 = vmatprep.subr.bf16.mxu0 0
    %1057 = vmatpush1.bf16.msra.mxu0 0
    %1058 = vmatprep.subr.bf16.mxu0 0
    %1059 = vmatpush1.bf16.msra.mxu0 0
    %1060 = vmatprep.subr.bf16.mxu0 0
    %1061 = vmatpush1.bf16.msra.mxu0 0
    %1062 = vmatprep.subr.bf16.mxu0 0
    %1063 = vmatpush1.bf16.msra.mxu0 0
    %1064 = vmatprep.subr.bf16.mxu0 0
    %1065 = vmatpush1.bf16.msra.mxu0 0
    %1066 = vmatprep.subr.bf16.mxu0 0
    %1067 = vmatpush1.bf16.msra.mxu0 0
    %1068 = vmatprep.subr.bf16.mxu0 0
    %1069 = vmatpush1.bf16.msra.mxu0 0
    %1070 = vmatprep.subr.bf16.mxu0 0
    %1071 = vmatpush1.bf16.msra.mxu0 0
    %1072 = vmatprep.mubr.bf16.mxu0 0
    %1073 = vmatmul.mubr.bf16.gmra.mrb[0].mxu0 %v968
    %v1074 = vpop.f32.mrb[0].mxu0
    %v1075 = vadd.f32 %v990, %v1074
    %v1076 = vpop.f32.mrb[0].mxu0
    %v1077 = vpop.f32.mrb[0].mxu0
    %v1078 = vpop.f32.mrb[0].mxu0
    %1079 = vdwg.mxu0
    %vm1080 = vcmp.ge.f32.partialorder %v1075, 0.0
    %v1081 = vmul.f32 %v1075, 0.2
    %v1082 = vsel %vm1080, %v1075, %v1081
    %v1083 = vpack.c.bf16 %v1082, %v1082
    %v1084 = vld [vmem:[#allocation16] sm:$0xf]
    %v1085 = vld [vmem:[#allocation16 + $0x4] sm:$0xf]
    %v1086 = vld [vmem:[#allocation16 + $0x8] sm:$0xf]
    %v1087 = vld [vmem:[#allocation16 + $0xc] sm:$0xf]
    %v1088 = vld [vmem:[#allocation16 + $0x10] sm:$0xf]
    %v1089 = vld [vmem:[#allocation16 + $0x14] sm:$0xf]
    %v1090 = vld [vmem:[#allocation16 + $0x18] sm:$0xf]
    %v1091 = vld [vmem:[#allocation16 + $0x1c] sm:$0xf]
    %v1092 = vld [vmem:[#allocation16 + $0x20] sm:$0xf]
    %v1093 = vld [vmem:[#allocation16 + $0x24] sm:$0xf]
    %v1094 = vld [vmem:[#allocation16 + $0x28] sm:$0xf]
    %v1095 = vld [vmem:[#allocation16 + $0x2c] sm:$0xf]
    %v1096 = vld [vmem:[#allocation16 + $0x30] sm:$0xf]
    %v1097 = vld [vmem:[#allocation16 + $0x34] sm:$0xf]
    %v1098 = vld [vmem:[#allocation16 + $0x38] sm:$0xf]
    %v1099 = vld [vmem:[#allocation16 + $0x3c] sm:$0xf]
    %v1100 = vld [vmem:[#allocation28] sm:$0x1]
    %v1102 = vlaneseq
    %v1103 = vshrl.u32 %v1102, 7
    %v1104 = vsub.s32 0, %v1103
    %v1105 = vrot.slane %v1100, %v1104
    %v1123 = vunpack.c.l.b16 %v1084
    %v1124 = vunpack.c.l.b16 %v1085
    %v1125 = vunpack.c.l.b16 %v1086
    %v1126 = vunpack.c.l.b16 %v1087
    %v1127 = vunpack.c.l.b16 %v1088
    %v1128 = vunpack.c.l.b16 %v1089
    %v1129 = vunpack.c.l.b16 %v1090
    %v1130 = vunpack.c.l.b16 %v1091
    %v1131 = vunpack.c.l.b16 %v1092
    %v1132 = vunpack.c.l.b16 %v1093
    %v1133 = vunpack.c.l.b16 %v1094
    %v1134 = vunpack.c.l.b16 %v1095
    %v1135 = vunpack.c.l.b16 %v1096
    %v1136 = vunpack.c.l.b16 %v1097
    %v1137 = vunpack.c.l.b16 %v1098
    %v1138 = vunpack.c.l.b16 %v1099
    %v1139 = vpack.c.b16 %v1124, %v1123
    %v1140 = vpack.c.b16 %v1126, %v1125
    %v1141 = vpack.c.b16 %v1128, %v1127
    %v1142 = vpack.c.b16 %v1130, %v1129
    %v1143 = vpack.c.b16 %v1132, %v1131
    %v1144 = vpack.c.b16 %v1134, %v1133
    %v1145 = vpack.c.b16 %v1136, %v1135
    %v1146 = vpack.c.b16 %v1138, %v1137
    %1155 = vmatprep.subr.bf16.mxu0 0
    %1156 = vmatpush1.bf16.msra.mxu0 %v1139
    %1157 = vmatprep.subr.bf16.mxu0 0
    %1158 = vmatpush1.bf16.msra.mxu0 %v1140
    %1159 = vmatprep.subr.bf16.mxu0 0
    %1160 = vmatpush1.bf16.msra.mxu0 %v1141
    %1161 = vmatprep.subr.bf16.mxu0 0
    %1162 = vmatpush1.bf16.msra.mxu0 %v1142
    %1163 = vmatprep.subr.bf16.mxu0 0
    %1164 = vmatpush1.bf16.msra.mxu0 %v1143
    %1165 = vmatprep.subr.bf16.mxu0 0
    %1166 = vmatpush1.bf16.msra.mxu0 %v1144
    %1167 = vmatprep.subr.bf16.mxu0 0
    %1168 = vmatpush1.bf16.msra.mxu0 %v1145
    %1169 = vmatprep.subr.bf16.mxu0 0
    %1170 = vmatpush1.bf16.msra.mxu0 %v1146
    %1171 = vmatprep.subr.bf16.mxu0 0
    %1172 = vmatpush1.bf16.msra.mxu0 0
    %1173 = vmatprep.subr.bf16.mxu0 0
    %1174 = vmatpush1.bf16.msra.mxu0 0
    %1175 = vmatprep.subr.bf16.mxu0 0
    %1176 = vmatpush1.bf16.msra.mxu0 0
    %1177 = vmatprep.subr.bf16.mxu0 0
    %1178 = vmatpush1.bf16.msra.mxu0 0
    %1179 = vmatprep.subr.bf16.mxu0 0
    %1180 = vmatpush1.bf16.msra.mxu0 0
    %1181 = vmatprep.subr.bf16.mxu0 0
    %1182 = vmatpush1.bf16.msra.mxu0 0
    %1183 = vmatprep.subr.bf16.mxu0 0
    %1184 = vmatpush1.bf16.msra.mxu0 0
    %1185 = vmatprep.subr.bf16.mxu0 0
    %1186 = vmatpush1.bf16.msra.mxu0 0
    %1187 = vmatprep.mubr.bf16.mxu0 0
    %1188 = vmatmul.mubr.bf16.gmra.mrb[0].mxu0 %v1083
    %v1189 = vpop.f32.mrb[0].mxu0
    %v1190 = vadd.f32 %v1105, %v1189
    %v1191 = vpop.f32.mrb[0].mxu0
    %v1192 = vpop.f32.mrb[0].mxu0
    %v1193 = vpop.f32.mrb[0].mxu0
    %1194 = vdwg.mxu0
    %1195 = vst [vmem:[#allocation29] sm:$0xff] %v1190
    // Predicated region
    $region138: #{tpu_custom_call.1} parent=1 // pred_check
      _
    $region139: #{tpu_custom_call.1} parent=1 // pred_check_branch
      %1197 = sbr.rel (0) target = $region141
    $region140: #{tpu_custom_call.1} parent=1 // pred_region
      %s1199 = ssub.s32 128, 128
      %1200 = vsyncadd [#allocation4], %s1199
      %s1202 = sshll.u32 [#allocation29], 4
      %s1203 = int_to_ptr.vmem [resolvable:$true] %s1202
      %1205 = dma.vmem_to_hbm [thread:$0]  %s1203, 128, %s17, [#allocation4]
    $region141: #{tpu_custom_call.1} parent=1 // pred_fallthru
      _
    // Predicated region
    $region142: #{tpu_custom_call.1} parent=1 // pred_check
      _
    $region143: #{tpu_custom_call.1} parent=1 // pred_check_branch
      %1207 = sbr.rel (0) target = $region145
    $region144: #{tpu_custom_call.1} parent=1 // pred_region
      %1208 = dma.done [#allocation4], 128
    $region145: #{tpu_custom_call.1} parent=1 // pred_fallthru
      _
    %1209 = vsyncpa [#allocation3], 1
    %1210 = vsyncpa [#allocation6], 1
    %1211 = vsyncpa [#allocation9], 1
    %1212 = vsyncpa [#allocation12], 1
    %1213 = vsyncpa [#allocation15], 1
    %1214 = vsyncpa [#allocation18], 1
    %1215 = vsyncpa [#allocation21], 1
    %1216 = vsyncpa [#allocation24], 1
    %1217 = vsyncpa [#allocation27], 1
    %1218 = vsyncpa [#allocation4], 1

</llo_original>
